<compile_context>
chip_gen: v5e
topology: v5e:2x2
jax: 0.10.0
libtpu: 0.0.40
codegen_flags: <defaults>
</compile_context>

<pallas_src>
import jax
import jax.numpy as jnp
from jax.experimental import pallas as pl
from jax.experimental.pallas import tpu as pltpu


def _netvlad_kernel(xt_ref, wsa_ref, bsa_ref, cent_ref, w2w_ref, mask_ref,
                    sel_ref, b2_ref, out_ref):
    """Single grid step, whole batch.

    xt_ref   : (C+1, B*N)  channel-major features, column = b*N + n;
                           last row is all ones (fuses a_sum into VLAD matmul)
    wsa_ref  : (K, C)      soft-assignment 1x1-conv weight
    bsa_ref  : (K, 1)      soft-assignment bias
    cent_ref : (K, C)      cluster centroids
    w2w_ref  : (C, K*O)    reduct_feat weight, [c, k*O+o] = W2[o, k*C+c]
    mask_ref : (K, K*O)    block-diag selector, [k', k*O+o] = (k' == k)
    sel_ref  : (K*O, O)    lane-fold selector,  [k*O+o', o] = (o' == o)
    b2_ref   : (1, O)      reduct_feat bias
    out_ref  : (B, O)      lane-dense output (caller re-adds trailing 1)
    """
    Cp1, BN = xt_ref.shape
    C = Cp1 - 1
    B, _ = out_ref.shape
    N = BN // B

    x = xt_ref[...]                                           # (C+1, B*N)

    # ---- descriptor-wise L2 normalization over channels (rows 0..C-1) ----
    xm = x[:C, :]                                             # (C, B*N)
    ssq = jnp.sum(xm * xm, axis=0, keepdims=True)             # (1, B*N)
    inv = jax.lax.rsqrt(jnp.maximum(ssq, 1e-24))              # = 1/max(||x||,1e-12)
    rows = jax.lax.broadcasted_iota(jnp.int32, (Cp1, BN), 0)
    xe = jnp.where(rows < C, x * inv, x)                      # keep ones row == 1
    xn = xe[:C, :]                                            # (C, B*N) normalized

    # ---- soft assignment: 1x1 conv (matmul) + softmax over clusters ----
    s = jnp.dot(wsa_ref[...], xn,
                preferred_element_type=jnp.float32) + bsa_ref[...]   # (K, B*N)
    s = s - jnp.max(s, axis=0, keepdims=True)
    e = jnp.exp(s)
    a = e * pl.reciprocal(jnp.sum(e, axis=0, keepdims=True), approx=True)

    # ---- per-batch VLAD aggregation + norms + reduct_feat (B is tiny/static) ----
    for b in range(B):
        xe_b = xe[:, b * N:(b + 1) * N]                       # (C+1, N)
        a_b = a[:, b * N:(b + 1) * N]                         # (K, N)

        # Contract over points.  RHS is the small (K, N) tile, so any
        # compiler-inserted transpose is cheap.  Row C of the result holds
        # sum_n a[k, n] (thanks to the appended ones row).
        res = jax.lax.dot_general(xe_b, a_b, (((1,), (1,)), ((), ())),
                                  preferred_element_type=jnp.float32)  # (C+1, K)
        res = jnp.transpose(res)                              # (K, C+1), tiny

        a_sum = res[:, C:C + 1]                               # (K, 1)
        v = res[:, :C] - cent_ref[...] * a_sum                # (K, C)

        # intra-cluster L2 norm (over channels)
        rsq = jnp.sum(v * v, axis=1, keepdims=True)           # (K, 1)
        vn = v * jax.lax.rsqrt(jnp.maximum(rsq, 1e-24))
        # global L2 norm over the flattened (K*C,) vector
        gsq = jnp.sum(jnp.sum(vn * vn, axis=1, keepdims=True),
                      axis=0, keepdims=True)                  # (1, 1)
        vf = vn * jax.lax.rsqrt(jnp.maximum(gsq, 1e-24))      # (K, C)

        # reduct_feat 1x1 conv, done on the MXU without any flatten/reshape:
        #   t[k', k*O+o] = sum_c vf[k', c] * W2[o, k*C+c]
        #   keep only the k' == k blocks, fold lanes mod O, add bias, ReLU.
        t = jnp.dot(vf, w2w_ref[...],
                    preferred_element_type=jnp.float32)       # (K, K*O)
        colsum = jnp.sum(t * mask_ref[...], axis=0, keepdims=True)   # (1, K*O)
        row = jnp.dot(colsum, sel_ref[...],
                      preferred_element_type=jnp.float32) + b2_ref[...]  # (1, O)
        out_ref[pl.ds(b, 1), :] = jnp.maximum(row, 0.0)       # ReLU


def netvlad_wrapper_forward(x, w_sa, b_sa, centroids, w2, b2):
    """x: (B, C, N) float32.  Returns (B, O, 1) like the PyTorch module."""
    B, C, N = x.shape
    K = w_sa.shape[0]
    O = w2.shape[0]

    # One-time layout prep (plain XLA ops, outside the kernel).
    xt = jnp.transpose(x, (1, 0, 2)).reshape(C, B * N)        # column = b*N + n
    xt1 = jnp.concatenate([xt, jnp.ones((1, B * N), x.dtype)], axis=0)
    w2w = w2.reshape(O, K, C).transpose(2, 1, 0).reshape(C, K * O)
    mask = jnp.repeat(jnp.eye(K, dtype=x.dtype), O, axis=1)   # (K, K*O)
    sel = jnp.tile(jnp.eye(O, dtype=x.dtype), (K, 1))         # (K*O, O)
    bsa = b_sa.reshape(K, 1)
    b2r = b2.reshape(1, O)

    out2d = pl.pallas_call(
        _netvlad_kernel,
        out_shape=jax.ShapeDtypeStruct((B, O), jnp.float32),
        grid_spec=pltpu.PrefetchScalarGridSpec(
            num_scalar_prefetch=0,
            grid=(1,),                      # whole batch in one fused step
            in_specs=[
                pl.BlockSpec((C + 1, B * N), lambda i: (0, 0)),
                pl.BlockSpec((K, C), lambda i: (0, 0)),
                pl.BlockSpec((K, 1), lambda i: (0, 0)),
                pl.BlockSpec((K, C), lambda i: (0, 0)),
                pl.BlockSpec((C, K * O), lambda i: (0, 0)),
                pl.BlockSpec((K, K * O), lambda i: (0, 0)),
                pl.BlockSpec((K * O, O), lambda i: (0, 0)),
                pl.BlockSpec((1, O), lambda i: (0, 0)),
            ],
            out_specs=pl.BlockSpec((B, O), lambda i: (0, 0)),
        ),
        # Single grid step => megacore semantics are moot; "arbitrary" is safe
        # on all of v5e/v6e/v7x.
        compiler_params=pltpu.CompilerParams(
            dimension_semantics=("arbitrary",)),
    )(xt1, w_sa, bsa, centroids, w2w, mask, sel, b2r)

    return out2d[..., None]                                    # (B, O, 1)


def reference_forward(x, w_sa, b_sa, centroids, w2, b2):
    """Pure-JAX reference mirroring the PyTorch forward."""
    hp = jax.lax.Precision.HIGHEST
    B = x.shape[0]
    xn = x / jnp.maximum(jnp.linalg.norm(x, axis=1, keepdims=True), 1e-12)
    s = jnp.einsum('kc,bcn->bkn', w_sa, xn, precision=hp) + b_sa[None, :, None]
    a = jax.nn.softmax(s, axis=1)
    v = jnp.einsum('bkn,bcn->bkc', a, xn, precision=hp) \
        - centroids[None] * jnp.sum(a, axis=2)[..., None]
    vn = v / jnp.maximum(jnp.linalg.norm(v, axis=2, keepdims=True), 1e-12)
    vf = vn.reshape(B, -1)
    vf = vf / jnp.maximum(jnp.linalg.norm(vf, axis=1, keepdims=True), 1e-12)
    out = jnp.matmul(vf, w2.T, precision=hp) + b2[None, :]
    return jnp.maximum(out, 0.0)[..., None]


if __name__ == "__main__":
    B, C, N = 2, 64, 128          # batch, num_in_channels, num points
    K, O = 13, 32                 # num_clusters, num_out_channels

    key = jax.random.PRNGKey(0)
    kx, kw, kb, kc, kw2 = jax.random.split(key, 5)

    x = jax.random.normal(kx, (B, C, N), dtype=jnp.float32)

    # NetVLAD params (init per NetVLAD._init_params / torch.rand)
    w_sa = jax.random.normal(kw, (K, C), dtype=jnp.float32) / jnp.sqrt(C)
    b_sa = jax.random.normal(kb, (K,), dtype=jnp.float32) / jnp.sqrt(C)
    centroids = jax.random.uniform(kc, (K, C), dtype=jnp.float32)

    # reduct_feat Conv1d params (init per Conv1d_wrapper.weight_init)
    w2 = jax.random.normal(kw2, (O, K * C), dtype=jnp.float32) * jnp.sqrt(2.0 / (K * C))
    b2 = jnp.zeros((O,), dtype=jnp.float32)

    y = netvlad_wrapper_forward(x, w_sa, b_sa, centroids, w2, b2)
    y = jax.block_until_ready(y)

    y_ref = reference_forward(x, w_sa, b_sa, centroids, w2, b2)
    assert y.shape == (B, O, 1)
    # Tolerance 1e-3: the EUP approx reciprocal in the softmax (~2^-12 rel.)
    # is the only intentional deviation from the exact reference.
    err = jnp.max(jnp.abs(y - y_ref))
    assert jnp.allclose(y, y_ref, rtol=1e-3, atol=1e-3), f"max abs err {err}"

    print("KERNEL_OK")
</pallas_src>

<mosaic_0001>
module attributes {stable_mosaic.version = 11 : i64} {
  func.func @_netvlad_kernel(%arg0: i32, %arg1: memref<65x256xf32, #tpu.memory_space<vmem>>, %arg2: memref<13x64xf32, #tpu.memory_space<vmem>>, %arg3: memref<13x1xf32, #tpu.memory_space<vmem>>, %arg4: memref<13x64xf32, #tpu.memory_space<vmem>>, %arg5: memref<64x416xf32, #tpu.memory_space<vmem>>, %arg6: memref<13x416xf32, #tpu.memory_space<vmem>>, %arg7: memref<416x32xf32, #tpu.memory_space<vmem>>, %arg8: memref<1x32xf32, #tpu.memory_space<vmem>>, %arg9: memref<2x32xf32, #tpu.memory_space<vmem>>) attributes {dimension_semantics = [#tpu.dimension_semantics<arbitrary>], iteration_bounds = array<i64: 1>, scalar_prefetch = 0 : i64, scratch_operands = 0 : i64, tpu.core_type = #tpu.core_type<tc>, window_params = [{pipeline_mode = #tpu.pipeline_mode<synchronous>, transform_indices = @transform_0, window_bounds = array<i64: 65, 256>}, {pipeline_mode = #tpu.pipeline_mode<synchronous>, transform_indices = @transform_1, window_bounds = array<i64: 13, 64>}, {pipeline_mode = #tpu.pipeline_mode<synchronous>, transform_indices = @transform_2, window_bounds = array<i64: 13, 1>}, {pipeline_mode = #tpu.pipeline_mode<synchronous>, transform_indices = @transform_3, window_bounds = array<i64: 13, 64>}, {pipeline_mode = #tpu.pipeline_mode<synchronous>, transform_indices = @transform_4, window_bounds = array<i64: 64, 416>}, {pipeline_mode = #tpu.pipeline_mode<synchronous>, transform_indices = @transform_5, window_bounds = array<i64: 13, 416>}, {pipeline_mode = #tpu.pipeline_mode<synchronous>, transform_indices = @transform_6, window_bounds = array<i64: 416, 32>}, {pipeline_mode = #tpu.pipeline_mode<synchronous>, transform_indices = @transform_7, window_bounds = array<i64: 1, 32>}, {pipeline_mode = #tpu.pipeline_mode<synchronous>, transform_indices = @transform_8, window_bounds = array<i64: 2, 32>}]} {
    %c0 = arith.constant 0 : index
    %c0_0 = arith.constant 0 : index
    %0 = vector.load %arg1[%c0, %c0_0] : memref<65x256xf32, #tpu.memory_space<vmem>>, vector<65x256xf32>
    %1 = vector.extract_strided_slice %0 {offsets = [0, 0], sizes = [64, 256], strides = [1, 1]} : vector<65x256xf32> to vector<64x256xf32>
    %2 = arith.mulf %1, %1 : vector<64x256xf32>
    %cst = arith.constant dense<0.000000e+00> : vector<256xf32>
    %3 = vector.multi_reduction <add>, %2, %cst [0] : vector<64x256xf32> to vector<256xf32>
    %4 = vector.shape_cast %3 : vector<256xf32> to vector<1x256xf32>
    %cst_1 = arith.constant 1.000000e-24 : f32
    %5 = vector.broadcast %cst_1 : f32 to vector<1x256xf32>
    %6 = arith.maximumf %4, %5 : vector<1x256xf32>
    %7 = math.rsqrt %6 : vector<1x256xf32>
    %8 = tpu.iota {dimensions = array<i32: 0>} : vector<65x256xi32>
    %c64_i32 = arith.constant 64 : i32
    %9 = vector.broadcast %c64_i32 : i32 to vector<65x256xi32>
    %10 = arith.cmpi slt, %8, %9 : vector<65x256xi32>
    %11 = vector.broadcast %7 : vector<1x256xf32> to vector<65x256xf32>
    %12 = arith.mulf %0, %11 : vector<65x256xf32>
    %13 = arith.select %10, %12, %0 : vector<65x256xi1>, vector<65x256xf32>
    %14 = vector.extract_strided_slice %13 {offsets = [0, 0], sizes = [64, 256], strides = [1, 1]} : vector<65x256xf32> to vector<64x256xf32>
    %c0_2 = arith.constant 0 : index
    %c0_3 = arith.constant 0 : index
    %15 = vector.load %arg2[%c0_2, %c0_3] : memref<13x64xf32, #tpu.memory_space<vmem>>, vector<13x64xf32>
    %cst_4 = arith.constant dense<0.000000e+00> : vector<13x256xf32>
    %16 = tpu.matmul %15, %14, %cst_4 {dimension_numbers = #tpu.dot_dimension_numbers<[1], [0], [0], [1], [0, 0, 1, 1], [], []>} : vector<13x64xf32>, vector<64x256xf32>, vector<13x256xf32> -> vector<13x256xf32>
    %c0_5 = arith.constant 0 : index
    %c0_6 = arith.constant 0 : index
    %17 = vector.load %arg3[%c0_5, %c0_6] : memref<13x1xf32, #tpu.memory_space<vmem>>, vector<13x1xf32>
    %18 = vector.broadcast %17 : vector<13x1xf32> to vector<13x256xf32>
    %19 = arith.addf %16, %18 : vector<13x256xf32>
    %cst_7 = arith.constant dense<0xFF800000> : vector<256xf32>
    %20 = vector.multi_reduction <maximumf>, %19, %cst_7 [0] : vector<13x256xf32> to vector<256xf32>
    %21 = vector.shape_cast %20 : vector<256xf32> to vector<1x256xf32>
    %22 = vector.broadcast %21 : vector<1x256xf32> to vector<13x256xf32>
    %23 = arith.subf %19, %22 : vector<13x256xf32>
    %24 = math.exp %23 : vector<13x256xf32>
    %cst_8 = arith.constant dense<0.000000e+00> : vector<256xf32>
    %25 = vector.multi_reduction <add>, %24, %cst_8 [0] : vector<13x256xf32> to vector<256xf32>
    %26 = vector.shape_cast %25 : vector<256xf32> to vector<1x256xf32>
    %27 = tpu.reciprocal %26 {approx = true} : vector<1x256xf32> -> vector<1x256xf32>
    %28 = vector.broadcast %27 : vector<1x256xf32> to vector<13x256xf32>
    %29 = arith.mulf %24, %28 : vector<13x256xf32>
    %30 = vector.extract_strided_slice %13 {offsets = [0, 0], sizes = [65, 128], strides = [1, 1]} : vector<65x256xf32> to vector<65x128xf32>
    %31 = vector.extract_strided_slice %29 {offsets = [0, 0], sizes = [13, 128], strides = [1, 1]} : vector<13x256xf32> to vector<13x128xf32>
    %cst_9 = arith.constant dense<0.000000e+00> : vector<65x13xf32>
    %32 = tpu.matmul %30, %31, %cst_9 {dimension_numbers = #tpu.dot_dimension_numbers<[1], [1], [0], [0], [0, 0, 1, 0], [], []>} : vector<65x128xf32>, vector<13x128xf32>, vector<65x13xf32> -> vector<65x13xf32>
    %33 = tpu.transpose %32, [1, 0] : vector<65x13xf32> -> vector<13x65xf32>
    %34 = vector.extract_strided_slice %33 {offsets = [0, 64], sizes = [13, 1], strides = [1, 1]} : vector<13x65xf32> to vector<13x1xf32>
    %35 = vector.extract_strided_slice %33 {offsets = [0, 0], sizes = [13, 64], strides = [1, 1]} : vector<13x65xf32> to vector<13x64xf32>
    %c0_10 = arith.constant 0 : index
    %c0_11 = arith.constant 0 : index
    %36 = vector.load %arg4[%c0_10, %c0_11] : memref<13x64xf32, #tpu.memory_space<vmem>>, vector<13x64xf32>
    %37 = vector.broadcast %34 : vector<13x1xf32> to vector<13x64xf32>
    %38 = arith.mulf %36, %37 : vector<13x64xf32>
    %39 = arith.subf %35, %38 : vector<13x64xf32>
    %40 = arith.mulf %39, %39 : vector<13x64xf32>
    %cst_12 = arith.constant dense<0.000000e+00> : vector<13xf32>
    %41 = vector.multi_reduction <add>, %40, %cst_12 [1] : vector<13x64xf32> to vector<13xf32>
    %42 = vector.shape_cast %41 : vector<13xf32> to vector<13x1xf32>
    %cst_13 = arith.constant 1.000000e-24 : f32
    %43 = vector.broadcast %cst_13 : f32 to vector<13x1xf32>
    %44 = arith.maximumf %42, %43 : vector<13x1xf32>
    %45 = math.rsqrt %44 : vector<13x1xf32>
    %46 = vector.broadcast %45 : vector<13x1xf32> to vector<13x64xf32>
    %47 = arith.mulf %39, %46 : vector<13x64xf32>
    %48 = arith.mulf %47, %47 : vector<13x64xf32>
    %cst_14 = arith.constant dense<0.000000e+00> : vector<13xf32>
    %49 = vector.multi_reduction <add>, %48, %cst_14 [1] : vector<13x64xf32> to vector<13xf32>
    %50 = vector.shape_cast %49 : vector<13xf32> to vector<13x1xf32>
    %cst_15 = arith.constant dense<0.000000e+00> : vector<1xf32>
    %51 = vector.multi_reduction <add>, %50, %cst_15 [0] : vector<13x1xf32> to vector<1xf32>
    %52 = vector.shape_cast %51 : vector<1xf32> to vector<1x1xf32>
    %cst_16 = arith.constant 1.000000e-24 : f32
    %53 = vector.broadcast %cst_16 : f32 to vector<1x1xf32>
    %54 = arith.maximumf %52, %53 : vector<1x1xf32>
    %55 = math.rsqrt %54 : vector<1x1xf32>
    %56 = vector.broadcast %55 : vector<1x1xf32> to vector<13x64xf32>
    %57 = arith.mulf %47, %56 : vector<13x64xf32>
    %c0_17 = arith.constant 0 : index
    %c0_18 = arith.constant 0 : index
    %58 = vector.load %arg5[%c0_17, %c0_18] : memref<64x416xf32, #tpu.memory_space<vmem>>, vector<64x416xf32>
    %cst_19 = arith.constant dense<0.000000e+00> : vector<13x416xf32>
    %59 = tpu.matmul %57, %58, %cst_19 {dimension_numbers = #tpu.dot_dimension_numbers<[1], [0], [0], [1], [0, 0, 1, 1], [], []>} : vector<13x64xf32>, vector<64x416xf32>, vector<13x416xf32> -> vector<13x416xf32>
    %c0_20 = arith.constant 0 : index
    %c0_21 = arith.constant 0 : index
    %60 = vector.load %arg6[%c0_20, %c0_21] : memref<13x416xf32, #tpu.memory_space<vmem>>, vector<13x416xf32>
    %61 = arith.mulf %59, %60 : vector<13x416xf32>
    %cst_22 = arith.constant dense<0.000000e+00> : vector<416xf32>
    %62 = vector.multi_reduction <add>, %61, %cst_22 [0] : vector<13x416xf32> to vector<416xf32>
    %63 = vector.shape_cast %62 : vector<416xf32> to vector<1x416xf32>
    %c0_23 = arith.constant 0 : index
    %c0_24 = arith.constant 0 : index
    %64 = vector.load %arg7[%c0_23, %c0_24] : memref<416x32xf32, #tpu.memory_space<vmem>>, vector<416x32xf32>
    %cst_25 = arith.constant dense<0.000000e+00> : vector<1x32xf32>
    %65 = tpu.matmul %63, %64, %cst_25 {dimension_numbers = #tpu.dot_dimension_numbers<[1], [0], [0], [1], [0, 0, 1, 1], [], []>} : vector<1x416xf32>, vector<416x32xf32>, vector<1x32xf32> -> vector<1x32xf32>
    %c0_26 = arith.constant 0 : index
    %c0_27 = arith.constant 0 : index
    %66 = vector.load %arg8[%c0_26, %c0_27] : memref<1x32xf32, #tpu.memory_space<vmem>>, vector<1x32xf32>
    %67 = arith.addf %65, %66 : vector<1x32xf32>
    %cst_28 = arith.constant 0.000000e+00 : f32
    %68 = vector.broadcast %cst_28 : f32 to vector<1x32xf32>
    %69 = arith.maximumf %67, %68 : vector<1x32xf32>
    %c0_29 = arith.constant 0 : index
    %c0_30 = arith.constant 0 : index
    %70 = vector.load %arg9[%c0_29, %c0_30] : memref<2x32xf32, #tpu.memory_space<vmem>>, vector<1x32xf32>
    tpu.vector_store %arg9[%c0_29, %c0_30], %69 {strides = array<i32>} : memref<2x32xf32, #tpu.memory_space<vmem>>, vector<1x32xf32>,
    %71 = vector.extract_strided_slice %13 {offsets = [0, 128], sizes = [65, 128], strides = [1, 1]} : vector<65x256xf32> to vector<65x128xf32>
    %72 = vector.extract_strided_slice %29 {offsets = [0, 128], sizes = [13, 128], strides = [1, 1]} : vector<13x256xf32> to vector<13x128xf32>
    %cst_31 = arith.constant dense<0.000000e+00> : vector<65x13xf32>
    %73 = tpu.matmul %71, %72, %cst_31 {dimension_numbers = #tpu.dot_dimension_numbers<[1], [1], [0], [0], [0, 0, 1, 0], [], []>} : vector<65x128xf32>, vector<13x128xf32>, vector<65x13xf32> -> vector<65x13xf32>
    %74 = tpu.transpose %73, [1, 0] : vector<65x13xf32> -> vector<13x65xf32>
    %75 = vector.extract_strided_slice %74 {offsets = [0, 64], sizes = [13, 1], strides = [1, 1]} : vector<13x65xf32> to vector<13x1xf32>
    %76 = vector.extract_strided_slice %74 {offsets = [0, 0], sizes = [13, 64], strides = [1, 1]} : vector<13x65xf32> to vector<13x64xf32>
    %c0_32 = arith.constant 0 : index
    %c0_33 = arith.constant 0 : index
    %77 = vector.load %arg4[%c0_32, %c0_33] : memref<13x64xf32, #tpu.memory_space<vmem>>, vector<13x64xf32>
    %78 = vector.broadcast %75 : vector<13x1xf32> to vector<13x64xf32>
    %79 = arith.mulf %77, %78 : vector<13x64xf32>
    %80 = arith.subf %76, %79 : vector<13x64xf32>
    %81 = arith.mulf %80, %80 : vector<13x64xf32>
    %cst_34 = arith.constant dense<0.000000e+00> : vector<13xf32>
    %82 = vector.multi_reduction <add>, %81, %cst_34 [1] : vector<13x64xf32> to vector<13xf32>
    %83 = vector.shape_cast %82 : vector<13xf32> to vector<13x1xf32>
    %cst_35 = arith.constant 1.000000e-24 : f32
    %84 = vector.broadcast %cst_35 : f32 to vector<13x1xf32>
    %85 = arith.maximumf %83, %84 : vector<13x1xf32>
    %86 = math.rsqrt %85 : vector<13x1xf32>
    %87 = vector.broadcast %86 : vector<13x1xf32> to vector<13x64xf32>
    %88 = arith.mulf %80, %87 : vector<13x64xf32>
    %89 = arith.mulf %88, %88 : vector<13x64xf32>
    %cst_36 = arith.constant dense<0.000000e+00> : vector<13xf32>
    %90 = vector.multi_reduction <add>, %89, %cst_36 [1] : vector<13x64xf32> to vector<13xf32>
    %91 = vector.shape_cast %90 : vector<13xf32> to vector<13x1xf32>
    %cst_37 = arith.constant dense<0.000000e+00> : vector<1xf32>
    %92 = vector.multi_reduction <add>, %91, %cst_37 [0] : vector<13x1xf32> to vector<1xf32>
    %93 = vector.shape_cast %92 : vector<1xf32> to vector<1x1xf32>
    %cst_38 = arith.constant 1.000000e-24 : f32
    %94 = vector.broadcast %cst_38 : f32 to vector<1x1xf32>
    %95 = arith.maximumf %93, %94 : vector<1x1xf32>
    %96 = math.rsqrt %95 : vector<1x1xf32>
    %97 = vector.broadcast %96 : vector<1x1xf32> to vector<13x64xf32>
    %98 = arith.mulf %88, %97 : vector<13x64xf32>
    %c0_39 = arith.constant 0 : index
    %c0_40 = arith.constant 0 : index
    %99 = vector.load %arg5[%c0_39, %c0_40] : memref<64x416xf32, #tpu.memory_space<vmem>>, vector<64x416xf32>
    %cst_41 = arith.constant dense<0.000000e+00> : vector<13x416xf32>
    %100 = tpu.matmul %98, %99, %cst_41 {dimension_numbers = #tpu.dot_dimension_numbers<[1], [0], [0], [1], [0, 0, 1, 1], [], []>} : vector<13x64xf32>, vector<64x416xf32>, vector<13x416xf32> -> vector<13x416xf32>
    %c0_42 = arith.constant 0 : index
    %c0_43 = arith.constant 0 : index
    %101 = vector.load %arg6[%c0_42, %c0_43] : memref<13x416xf32, #tpu.memory_space<vmem>>, vector<13x416xf32>
    %102 = arith.mulf %100, %101 : vector<13x416xf32>
    %cst_44 = arith.constant dense<0.000000e+00> : vector<416xf32>
    %103 = vector.multi_reduction <add>, %102, %cst_44 [0] : vector<13x416xf32> to vector<416xf32>
    %104 = vector.shape_cast %103 : vector<416xf32> to vector<1x416xf32>
    %c0_45 = arith.constant 0 : index
    %c0_46 = arith.constant 0 : index
    %105 = vector.load %arg7[%c0_45, %c0_46] : memref<416x32xf32, #tpu.memory_space<vmem>>, vector<416x32xf32>
    %cst_47 = arith.constant dense<0.000000e+00> : vector<1x32xf32>
    %106 = tpu.matmul %104, %105, %cst_47 {dimension_numbers = #tpu.dot_dimension_numbers<[1], [0], [0], [1], [0, 0, 1, 1], [], []>} : vector<1x416xf32>, vector<416x32xf32>, vector<1x32xf32> -> vector<1x32xf32>
    %c0_48 = arith.constant 0 : index
    %c0_49 = arith.constant 0 : index
    %107 = vector.load %arg8[%c0_48, %c0_49] : memref<1x32xf32, #tpu.memory_space<vmem>>, vector<1x32xf32>
    %108 = arith.addf %106, %107 : vector<1x32xf32>
    %cst_50 = arith.constant 0.000000e+00 : f32
    %109 = vector.broadcast %cst_50 : f32 to vector<1x32xf32>
    %110 = arith.maximumf %108, %109 : vector<1x32xf32>
    %c1 = arith.constant 1 : index
    %c0_51 = arith.constant 0 : index
    %111 = vector.load %arg9[%c1, %c0_51] : memref<2x32xf32, #tpu.memory_space<vmem>>, vector<1x32xf32>
    tpu.vector_store %arg9[%c1, %c0_51], %110 {strides = array<i32>} : memref<2x32xf32, #tpu.memory_space<vmem>>, vector<1x32xf32>,
    return
  }
  func.func @transform_0(%arg0: i32) -> (i32, i32) {
    %c0_i32 = arith.constant 0 : i32
    %c0_i32_0 = arith.constant 0 : i32
    %c0_i32_1 = arith.constant 0 : i32
    return %c0_i32, %c0_i32_0 : i32, i32
  }
  func.func @transform_1(%arg0: i32) -> (i32, i32) {
    %c0_i32 = arith.constant 0 : i32
    %c0_i32_0 = arith.constant 0 : i32
    %c0_i32_1 = arith.constant 0 : i32
    return %c0_i32, %c0_i32_0 : i32, i32
  }
  func.func @transform_2(%arg0: i32) -> (i32, i32) {
    %c0_i32 = arith.constant 0 : i32
    %c0_i32_0 = arith.constant 0 : i32
    %c0_i32_1 = arith.constant 0 : i32
    return %c0_i32, %c0_i32_0 : i32, i32
  }
  func.func @transform_3(%arg0: i32) -> (i32, i32) {
    %c0_i32 = arith.constant 0 : i32
    %c0_i32_0 = arith.constant 0 : i32
    %c0_i32_1 = arith.constant 0 : i32
    return %c0_i32, %c0_i32_0 : i32, i32
  }
  func.func @transform_4(%arg0: i32) -> (i32, i32) {
    %c0_i32 = arith.constant 0 : i32
    %c0_i32_0 = arith.constant 0 : i32
    %c0_i32_1 = arith.constant 0 : i32
    return %c0_i32, %c0_i32_0 : i32, i32
  }
  func.func @transform_5(%arg0: i32) -> (i32, i32) {
    %c0_i32 = arith.constant 0 : i32
    %c0_i32_0 = arith.constant 0 : i32
    %c0_i32_1 = arith.constant 0 : i32
    return %c0_i32, %c0_i32_0 : i32, i32
  }
  func.func @transform_6(%arg0: i32) -> (i32, i32) {
    %c0_i32 = arith.constant 0 : i32
    %c0_i32_0 = arith.constant 0 : i32
    %c0_i32_1 = arith.constant 0 : i32
    return %c0_i32, %c0_i32_0 : i32, i32
  }
  func.func @transform_7(%arg0: i32) -> (i32, i32) {
    %c0_i32 = arith.constant 0 : i32
    %c0_i32_0 = arith.constant 0 : i32
    %c0_i32_1 = arith.constant 0 : i32
    return %c0_i32, %c0_i32_0 : i32, i32
  }
  func.func @transform_8(%arg0: i32) -> (i32, i32) {
    %c0_i32 = arith.constant 0 : i32
    %c0_i32_0 = arith.constant 0 : i32
    %c0_i32_1 = arith.constant 0 : i32
    return %c0_i32, %c0_i32_0 : i32, i32
  }
}

</mosaic_0001>

<llo_original>
// kernel: tpu_custom_call.1
$region0: #{tpu_custom_call.1}
  #allocation0 [shape = 'u32[]', space=smem, size = 0x4, offset = 0x4, fixed_abs, tag = 'smem constant byte address 0x4 - core index']
  #allocation1 [shape = 'u32[72,128]{1,0:T(1,128)}', space=vmem, size = 0x9000, scoped, tag = 'internal scratch']
  %s0 = inlined_call_operand.vmem [shape: f32[65,256], index: 0, kind: input, shape index: {}]
  %s1 = inlined_call_operand.vmem [shape: f32[13,64], index: 1, kind: input, shape index: {}]
  %s2 = inlined_call_operand.vmem [shape: f32[13,1], index: 2, kind: input, shape index: {}]
  %s3 = inlined_call_operand.vmem [shape: f32[13,64], index: 3, kind: input, shape index: {}]
  %s4 = inlined_call_operand.vmem [shape: f32[64,416], index: 4, kind: input, shape index: {}]
  %s5 = inlined_call_operand.vmem [shape: f32[13,416], index: 5, kind: input, shape index: {}]
  %s6 = inlined_call_operand.vmem [shape: f32[416,32], index: 6, kind: input, shape index: {}]
  %s7 = inlined_call_operand.vmem [shape: f32[1,32], index: 7, kind: input, shape index: {}]
  %s8 = inlined_call_operand.hbm [shape: f32[2,32], index: 8, kind: output, shape index: {}]
  %s9 = sld [smem:[#allocation0]]
  $region42: #{tpu_custom_call.1} parent=0
    _
  %s11 = ssub.s32 1, %s9
  %s12 = scalar_select 0, %s11, %s9
  $region1: #{tpu_custom_call.1} parent=0
    #allocation2 [shape = 'u8[1024]{0}', space=vmem, size = 0x400, scoped, tag = 'output window, operand 0, single buffered']
    #allocation3 [shape = 's32[1]{0}', space=sflag, size = 0x4, scoped, tag = 'scoped memory for tpu_custom_call.1']
    %13 = vsyncpa [#allocation3], 0
    // Predicated region
    $region2: #{tpu_custom_call.1} parent=1 // pred_check
      _
    $region3: #{tpu_custom_call.1} parent=1 // pred_check_branch
      %15 = sbr.rel (0) target = $region5
    $region4: #{tpu_custom_call.1} parent=1 // pred_region
      _
    $region5: #{tpu_custom_call.1} parent=1 // pred_fallthru
      _
    // Predicated region
    $region6: #{tpu_custom_call.1} parent=1 // pred_check
      _
    $region7: #{tpu_custom_call.1} parent=1 // pred_check_branch
      %17 = sbr.rel (0) target = $region9
    $region8: #{tpu_custom_call.1} parent=1 // pred_region
      _
    $region9: #{tpu_custom_call.1} parent=1 // pred_fallthru
      _
    // Predicated region
    $region10: #{tpu_custom_call.1} parent=1 // pred_check
      _
    $region11: #{tpu_custom_call.1} parent=1 // pred_check_branch
      %19 = sbr.rel (0) target = $region13
    $region12: #{tpu_custom_call.1} parent=1 // pred_region
      _
    $region13: #{tpu_custom_call.1} parent=1 // pred_fallthru
      _
    // Predicated region
    $region14: #{tpu_custom_call.1} parent=1 // pred_check
      _
    $region15: #{tpu_custom_call.1} parent=1 // pred_check_branch
      %21 = sbr.rel (0) target = $region17
    $region16: #{tpu_custom_call.1} parent=1 // pred_region
      _
    $region17: #{tpu_custom_call.1} parent=1 // pred_fallthru
      _
    // Predicated region
    $region18: #{tpu_custom_call.1} parent=1 // pred_check
      _
    $region19: #{tpu_custom_call.1} parent=1 // pred_check_branch
      %23 = sbr.rel (0) target = $region21
    $region20: #{tpu_custom_call.1} parent=1 // pred_region
      _
    $region21: #{tpu_custom_call.1} parent=1 // pred_fallthru
      _
    // Predicated region
    $region22: #{tpu_custom_call.1} parent=1 // pred_check
      _
    $region23: #{tpu_custom_call.1} parent=1 // pred_check_branch
      %25 = sbr.rel (0) target = $region25
    $region24: #{tpu_custom_call.1} parent=1 // pred_region
      _
    $region25: #{tpu_custom_call.1} parent=1 // pred_fallthru
      _
    // Predicated region
    $region26: #{tpu_custom_call.1} parent=1 // pred_check
      _
    $region27: #{tpu_custom_call.1} parent=1 // pred_check_branch
      %27 = sbr.rel (0) target = $region29
    $region28: #{tpu_custom_call.1} parent=1 // pred_region
      _
    $region29: #{tpu_custom_call.1} parent=1 // pred_fallthru
      _
    // Predicated region
    $region30: #{tpu_custom_call.1} parent=1 // pred_check
      _
    $region31: #{tpu_custom_call.1} parent=1 // pred_check_branch
      %29 = sbr.rel (0) target = $region33
    $region32: #{tpu_custom_call.1} parent=1 // pred_region
      _
    $region33: #{tpu_custom_call.1} parent=1 // pred_fallthru
      _
    %v30 = vld [vmem:[%s0] sm:$0xff]
    %v31 = vld [vmem:[%s0 + $0x8] sm:$0xff]
    %v32 = vld [vmem:[%s0 + $0x10] sm:$0xff]
    %v33 = vld [vmem:[%s0 + $0x18] sm:$0xff]
    %v34 = vld [vmem:[%s0 + $0x20] sm:$0xff]
    %v35 = vld [vmem:[%s0 + $0x28] sm:$0xff]
    %v36 = vld [vmem:[%s0 + $0x30] sm:$0xff]
    %v37 = vld [vmem:[%s0 + $0x38] sm:$0xff]
    %v38 = vld [vmem:[%s0 + $0x40] sm:$0xff]
    %v39 = vld [vmem:[%s0 + $0x48] sm:$0xff]
    %v40 = vld [vmem:[%s0 + $0x50] sm:$0xff]
    %v41 = vld [vmem:[%s0 + $0x58] sm:$0xff]
    %v42 = vld [vmem:[%s0 + $0x60] sm:$0xff]
    %v43 = vld [vmem:[%s0 + $0x68] sm:$0xff]
    %v44 = vld [vmem:[%s0 + $0x70] sm:$0xff]
    %v45 = vld [vmem:[%s0 + $0x78] sm:$0xff]
    %v46 = vld [vmem:[%s0 + $0x80] sm:$0x1]
    %v47 = vld [vmem:[%s0 + $0x88] sm:$0x1]
    %v48 = vmul.f32 %v30, %v30
    %v49 = vmul.f32 %v31, %v31
    %v50 = vmul.f32 %v32, %v32
    %v51 = vmul.f32 %v33, %v33
    %v52 = vmul.f32 %v34, %v34
    %v53 = vmul.f32 %v35, %v35
    %v54 = vmul.f32 %v36, %v36
    %v55 = vmul.f32 %v37, %v37
    %v56 = vmul.f32 %v38, %v38
    %v57 = vmul.f32 %v39, %v39
    %v58 = vmul.f32 %v40, %v40
    %v59 = vmul.f32 %v41, %v41
    %v60 = vmul.f32 %v42, %v42
    %v61 = vmul.f32 %v43, %v43
    %v62 = vmul.f32 %v44, %v44
    %v63 = vmul.f32 %v45, %v45
    %v64 = vadd.f32 %v48, %v50
    %v65 = vadd.f32 %v64, %v52
    %v66 = vadd.f32 %v65, %v54
    %v67 = vadd.f32 %v66, %v56
    %v68 = vadd.f32 %v67, %v58
    %v69 = vadd.f32 %v68, %v60
    %v70 = vadd.f32 %v69, %v62
    %v71 = vrot.slane %v70, 4
    %v72 = vadd.f32 %v70, %v71
    %v73 = vrot.slane %v72, 2
    %v74 = vadd.f32 %v72, %v73
    %v75 = vrot.slane %v74, 1
    %v76 = vadd.f32 %v74, %v75
    %v77 = vadd.f32 %v49, %v51
    %v78 = vadd.f32 %v77, %v53
    %v79 = vadd.f32 %v78, %v55
    %v80 = vadd.f32 %v79, %v57
    %v81 = vadd.f32 %v80, %v59
    %v82 = vadd.f32 %v81, %v61
    %v83 = vadd.f32 %v82, %v63
    %v84 = vrot.slane %v83, 4
    %v85 = vadd.f32 %v83, %v84
    %v86 = vrot.slane %v85, 2
    %v87 = vadd.f32 %v85, %v86
    %v88 = vrot.slane %v87, 1
    %v89 = vadd.f32 %v87, %v88
    %v90 = vmax.f32 %v76, 1e-24
    %v91 = vmax.f32 %v89, 1e-24
    %v92 = vrsqrt.pop %v90
    %v93 = vmul.f32 %v92, %v90
    %v94 = vmul.f32 %v93, %v92
    %v95 = vmul.f32 0.5, %v94
    %v96 = vsub.f32 1.5, %v95
    %v97 = vmul.f32 %v92, %v96
    %vm98 = vweird.f32 %v90
    %vm99 = vweird.f32 %v92
    %vm100 = vmor %vm98, %vm99
    %v101 = vsel %vm100, %v92, %v97
    %v102 = vrsqrt.pop %v91
    %v103 = vmul.f32 %v102, %v91
    %v104 = vmul.f32 %v103, %v102
    %v105 = vmul.f32 0.5, %v104
    %v106 = vsub.f32 1.5, %v105
    %v107 = vmul.f32 %v102, %v106
    %vm108 = vweird.f32 %v91
    %vm109 = vweird.f32 %v102
    %vm110 = vmor %vm108, %vm109
    %v111 = vsel %vm110, %v102, %v107
    %v112 = vlaneseq
    %v113 = vshrl.u32 %v112, 7
    %v114 = vadd.s32 %v113, 8
    %v115 = vadd.s32 %v113, 16
    %v116 = vadd.s32 %v113, 24
    %v117 = vadd.s32 %v113, 32
    %v118 = vadd.s32 %v113, 40
    %v119 = vadd.s32 %v113, 48
    %v120 = vadd.s32 %v113, 56
    %v121 = vadd.s32 %v113, 64
    %vm122 = vcmp.lt.s32.totalorder %v113, 64
    %vm123 = vcmp.lt.s32.totalorder %v114, 64
    %vm124 = vcmp.lt.s32.totalorder %v115, 64
    %vm125 = vcmp.lt.s32.totalorder %v116, 64
    %vm126 = vcmp.lt.s32.totalorder %v117, 64
    %vm127 = vcmp.lt.s32.totalorder %v118, 64
    %vm128 = vcmp.lt.s32.totalorder %v119, 64
    %vm129 = vcmp.lt.s32.totalorder %v120, 64
    %vm130 = vcmp.lt.s32.totalorder %v121, 64
    %v131 = vmul.f32 %v30, %v101
    %v132 = vmul.f32 %v31, %v111
    %v133 = vmul.f32 %v32, %v101
    %v134 = vmul.f32 %v33, %v111
    %v135 = vmul.f32 %v34, %v101
    %v136 = vmul.f32 %v35, %v111
    %v137 = vmul.f32 %v36, %v101
    %v138 = vmul.f32 %v37, %v111
    %v139 = vmul.f32 %v38, %v101
    %v140 = vmul.f32 %v39, %v111
    %v141 = vmul.f32 %v40, %v101
    %v142 = vmul.f32 %v41, %v111
    %v143 = vmul.f32 %v42, %v101
    %v144 = vmul.f32 %v43, %v111
    %v145 = vmul.f32 %v44, %v101
    %v146 = vmul.f32 %v45, %v111
    %v147 = vmul.f32 %v46, %v101
    %v148 = vmul.f32 %v47, %v111
    %v149 = vsel %vm122, %v131, %v30
    %v150 = vsel %vm122, %v132, %v31
    %v151 = vsel %vm123, %v133, %v32
    %v152 = vsel %vm123, %v134, %v33
    %v153 = vsel %vm124, %v135, %v34
    %v154 = vsel %vm124, %v136, %v35
    %v155 = vsel %vm125, %v137, %v36
    %v156 = vsel %vm125, %v138, %v37
    %v157 = vsel %vm126, %v139, %v38
    %v158 = vsel %vm126, %v140, %v39
    %v159 = vsel %vm127, %v141, %v40
    %v160 = vsel %vm127, %v142, %v41
    %v161 = vsel %vm128, %v143, %v42
    %v162 = vsel %vm128, %v144, %v43
    %v163 = vsel %vm129, %v145, %v44
    %v164 = vsel %vm129, %v146, %v45
    %v165 = vsel %vm130, %v147, %v46
    %v166 = vsel %vm130, %v148, %v47
    %v167 = vld [vmem:[%s1] sm:$0xff]
    %v168 = vld [vmem:[%s1 + $0x8] sm:$0x1f]
    %v169 = vld [vmem:[%s2] sm:$0xff]
    %v170 = vld [vmem:[%s2 + $0x8] sm:$0x1f]
    %172 = vset.pattern.permute.xlu0 0
    %173 = vperm.xlu0 %172, %v169
    %v174 = vpop.permute.xlu0 %173
    %177 = vset.pattern.permute.xlu0 0
    %178 = vperm.xlu0 %177, %v170
    %v179 = vpop.permute.xlu0 %178
    %vm181 = vcmask 523264
    %v183 = vsel %vm181, %v167, 0
    %v186 = vsel %vm181, %v168, 0
    %188 = vmatpush.msra.mxu0 0.0
    %189 = vmatpush.msra.mxu0 0.0
    %190 = vmatpush.msra.mxu0 0.0
    %191 = vmatpush.msra.mxu0 0.0
    %192 = vmatpush.msra.mxu0 0.0
    %193 = vmatpush.msra.mxu0 0.0
    %194 = vmatpush.msra.mxu0 0.0
    %195 = vmatpush.msra.mxu0 0.0
    %196 = vmatpush.msra.mxu0 %v163
    %197 = vmatpush.msra.mxu0 %v161
    %198 = vmatpush.msra.mxu0 %v159
    %199 = vmatpush.msra.mxu0 %v157
    %200 = vmatpush.msra.mxu0 %v155
    %201 = vmatpush.msra.mxu0 %v153
    %202 = vmatpush.msra.mxu0 %v151
    %203 = vmatpush.msra.mxu0 %v149
    %204 = vmatmul.f32.gmra.mxu0 %v183
    %v205 = vpop.f32.mrf.mxu0
    %v206 = vadd.f32 %v174, %v205
    %207 = vmatmul.f32.gmra.mxu0 %v186
    %v208 = vpop.f32.mrf.mxu0
    %v209 = vadd.f32 %v179, %v208
    %210 = vdwg.mxu0
    %211 = vmatpush.msra.mxu0 0.0
    %212 = vmatpush.msra.mxu0 0.0
    %213 = vmatpush.msra.mxu0 0.0
    %214 = vmatpush.msra.mxu0 0.0
    %215 = vmatpush.msra.mxu0 0.0
    %216 = vmatpush.msra.mxu0 0.0
    %217 = vmatpush.msra.mxu0 0.0
    %218 = vmatpush.msra.mxu0 0.0
    %219 = vmatpush.msra.mxu0 %v164
    %220 = vmatpush.msra.mxu0 %v162
    %221 = vmatpush.msra.mxu0 %v160
    %222 = vmatpush.msra.mxu0 %v158
    %223 = vmatpush.msra.mxu0 %v156
    %224 = vmatpush.msra.mxu0 %v154
    %225 = vmatpush.msra.mxu0 %v152
    %226 = vmatpush.msra.mxu0 %v150
    %227 = vmatmul.f32.gmra.mxu0 %v183
    %v228 = vpop.f32.mrf.mxu0
    %v229 = vadd.f32 %v174, %v228
    %230 = vmatmul.f32.gmra.mxu0 %v186
    %v231 = vpop.f32.mrf.mxu0
    %v232 = vadd.f32 %v179, %v231
    %233 = vdwg.mxu0
    %vm234 = vcmask 1044480
    %v235 = vsel %vm234, %v209, -inf
    %v236 = vmax.f32 %v206, %v235
    %v237 = vrot.slane %v236, 4
    %v238 = vmax.f32 %v236, %v237
    %v239 = vrot.slane %v238, 2
    %v240 = vmax.f32 %v238, %v239
    %v241 = vrot.slane %v240, 1
    %v242 = vmax.f32 %v240, %v241
    %v243 = vsel %vm234, %v232, -inf
    %v244 = vmax.f32 %v229, %v243
    %v245 = vrot.slane %v244, 4
    %v246 = vmax.f32 %v244, %v245
    %v247 = vrot.slane %v246, 2
    %v248 = vmax.f32 %v246, %v247
    %v249 = vrot.slane %v248, 1
    %v250 = vmax.f32 %v248, %v249
    %v251 = vsub.f32 %v206, %v242
    %v252 = vsub.f32 %v229, %v250
    %v253 = vsub.f32 %v209, %v242
    %v254 = vsub.f32 %v232, %v250
    %v255 = vmul.f32 %v251, 1.442695
    %v256 = vpow.pop %v255
    %v257 = vmul.f32 %v252, 1.442695
    %v258 = vpow.pop %v257
    %v259 = vmul.f32 %v253, 1.442695
    %v260 = vpow.pop %v259
    %v261 = vmul.f32 %v254, 1.442695
    %v262 = vpow.pop %v261
    %v263 = vsel %vm234, %v260, 0.0
    %v264 = vadd.f32 %v256, %v263
    %v265 = vrot.slane %v264, 4
    %v266 = vadd.f32 %v264, %v265
    %v267 = vrot.slane %v266, 2
    %v268 = vadd.f32 %v266, %v267
    %v269 = vrot.slane %v268, 1
    %v270 = vadd.f32 %v268, %v269
    %v271 = vsel %vm234, %v262, 0.0
    %v272 = vadd.f32 %v258, %v271
    %v273 = vrot.slane %v272, 4
    %v274 = vadd.f32 %v272, %v273
    %v275 = vrot.slane %v274, 2
    %v276 = vadd.f32 %v274, %v275
    %v277 = vrot.slane %v276, 1
    %v278 = vadd.f32 %v276, %v277
    %v279 = vrcp.pop %v270
    %v280 = vrcp.pop %v278
    %v281 = vmul.f32 %v256, %v279
    %v282 = vmul.f32 %v258, %v280
    %v283 = vmul.f32 %v260, %v279
    %v284 = vmul.f32 %v262, %v280
    %285 = vmatpush.xpose.msra.mxu0 0.0
    %286 = vmatpush.xpose.msra.mxu0 0.0
    %287 = vmatpush.xpose.msra.mxu0 0.0
    %288 = vmatpush.xpose.msra.mxu0 0.0
    %289 = vmatpush.xpose.msra.mxu0 0.0
    %290 = vmatpush.xpose.msra.mxu0 0.0
    %291 = vmatpush.xpose.msra.mxu0 0.0
    %292 = vmatpush.xpose.msra.mxu0 0.0
    %293 = vmatpush.xpose.msra.mxu0 0.0
    %294 = vmatpush.xpose.msra.mxu0 0.0
    %295 = vmatpush.xpose.msra.mxu0 0.0
    %296 = vmatpush.xpose.msra.mxu0 0.0
    %297 = vmatpush.xpose.msra.mxu0 0.0
    %298 = vmatpush.xpose.msra.mxu0 0.0
    %299 = vmatpush.xpose.msra.mxu0 %v283
    %300 = vmatpush.xpose.msra.mxu0 %v281
    %301 = vmatmul.f32.gmra.mxu0 %v149
    %v302 = vpop.f32.mrf.mxu0
    %v303 = vadd.f32 0.0, %v302
    %304 = vmatmul.f32.gmra.mxu0 %v151
    %v305 = vpop.f32.mrf.mxu0
    %v306 = vadd.f32 0.0, %v305
    %307 = vmatmul.f32.gmra.mxu0 %v153
    %v308 = vpop.f32.mrf.mxu0
    %v309 = vadd.f32 0.0, %v308
    %310 = vmatmul.f32.gmra.mxu0 %v155
    %v311 = vpop.f32.mrf.mxu0
    %v312 = vadd.f32 0.0, %v311
    %313 = vmatmul.f32.gmra.mxu0 %v157
    %v314 = vpop.f32.mrf.mxu0
    %v315 = vadd.f32 0.0, %v314
    %316 = vmatmul.f32.gmra.mxu0 %v159
    %v317 = vpop.f32.mrf.mxu0
    %v318 = vadd.f32 0.0, %v317
    %319 = vmatmul.f32.gmra.mxu0 %v161
    %v320 = vpop.f32.mrf.mxu0
    %v321 = vadd.f32 0.0, %v320
    %322 = vmatmul.f32.gmra.mxu0 %v163
    %v323 = vpop.f32.mrf.mxu0
    %v324 = vadd.f32 0.0, %v323
    %325 = vmatmul.f32.gmra.mxu0 %v165
    %v326 = vpop.f32.mrf.mxu0
    %v327 = vadd.f32 0.0, %v326
    %328 = vdwg.mxu0
    %329 = vxpose.xlu0.b32.start [1/16] %v303, 128
    %330 = vxpose.xlu0.b32.cont [2/16] %v306, 128
    %331 = vxpose.xlu0.b32.cont [3/16] %v309, 128
    %332 = vxpose.xlu0.b32.cont [4/16] %v312, 128
    %333 = vxpose.xlu0.b32.cont [5/16] %v315, 128
    %334 = vxpose.xlu0.b32.cont [6/16] %v318, 128
    %335 = vxpose.xlu0.b32.cont [7/16] %v321, 128
    %336 = vxpose.xlu0.b32.cont [8/16] %v324, 128
    %337 = vxpose.xlu0.b32.cont [9/16] %v327, 128
    %338 = vxpose.xlu0.b32.cont [10/16] 0.0, 128
    %339 = vxpose.xlu0.b32.cont [11/16] 0.0, 128
    %340 = vxpose.xlu0.b32.cont [12/16] 0.0, 128
    %341 = vxpose.xlu0.b32.cont [13/16] 0.0, 128
    %342 = vxpose.xlu0.b32.cont [14/16] 0.0, 128
    %343 = vxpose.xlu0.b32.cont [15/16] 0.0, 128
    %344 = vxpose.xlu0.b32.end [16/16] 0.0, 128
    %v345 = vpop.trf.xlu0
    %v346 = vpop.trf.xlu0
    %v347 = vpop.trf.xlu0
    %v348 = vpop.trf.xlu0
    %v349 = vpop.trf.xlu0
    %v350 = vpop.trf.xlu0
    %v351 = vpop.trf.xlu0
    %v352 = vpop.trf.xlu0
    %v353 = vpop.trf.xlu0
    %v354 = vpop.trf.xlu0
    %v355 = vpop.trf.xlu0
    %v356 = vpop.trf.xlu0
    %v357 = vpop.trf.xlu0
    %v358 = vpop.trf.xlu0
    %v359 = vpop.trf.xlu0
    %v360 = vpop.trf.xlu0
    %v361 = vld [vmem:[%s3] sm:$0xff]
    %v362 = vld [vmem:[%s3 + $0x8] sm:$0x1f]
    %364 = vset.pattern.permute.xlu0 64
    %365 = vperm.xlu0 %364, %v345
    %v366 = vpop.permute.xlu0 %365
    %369 = vset.pattern.permute.xlu0 64
    %370 = vperm.xlu0 %369, %v346
    %v371 = vpop.permute.xlu0 %370
    %v373 = vmul.f32 %v361, %v366
    %v374 = vmul.f32 %v362, %v371
    %v375 = vsub.f32 %v345, %v373
    %v376 = vsub.f32 %v346, %v374
    %v377 = vmul.f32 %v375, %v375
    %v378 = vmul.f32 %v376, %v376
    %v379 = vsel %vm181, %v377, 0.0
    %380 = vadd.xlane.f32.xlu0 %v379
    %v381 = vpop.xlane.xlu0 %380
    %vm382 = vcmask 520192
    %v383 = vsel %vm382, %v378, 0.0
    %384 = vadd.xlane.f32.xlu0 %v383
    %v385 = vpop.xlane.xlu0 %384
    %v386 = vmax.f32 %v381, 1e-24
    %v387 = vmax.f32 %v385, 1e-24
    %v388 = vrsqrt.pop %v386
    %v389 = vmul.f32 %v388, %v386
    %v390 = vmul.f32 %v389, %v388
    %v391 = vmul.f32 0.5, %v390
    %v392 = vsub.f32 1.5, %v391
    %v393 = vmul.f32 %v388, %v392
    %vm394 = vweird.f32 %v386
    %vm395 = vweird.f32 %v388
    %vm396 = vmor %vm394, %vm395
    %v397 = vsel %vm396, %v388, %v393
    %v398 = vrsqrt.pop %v387
    %v399 = vmul.f32 %v398, %v387
    %v400 = vmul.f32 %v399, %v398
    %v401 = vmul.f32 0.5, %v400
    %v402 = vsub.f32 1.5, %v401
    %v403 = vmul.f32 %v398, %v402
    %vm404 = vweird.f32 %v387
    %vm405 = vweird.f32 %v398
    %vm406 = vmor %vm404, %vm405
    %v407 = vsel %vm406, %v398, %v403
    %v408 = vmul.f32 %v375, %v397
    %v409 = vmul.f32 %v376, %v407
    %v410 = vmul.f32 %v408, %v408
    %v411 = vmul.f32 %v409, %v409
    %v412 = vsel %vm181, %v410, 0.0
    %413 = vadd.xlane.f32.xlu0 %v412
    %v414 = vpop.xlane.xlu0 %413
    %v415 = vsel %vm382, %v411, 0.0
    %416 = vadd.xlane.f32.xlu0 %v415
    %v417 = vpop.xlane.xlu0 %416
    %v418 = vsel %vm234, %v417, 0.0
    %v419 = vadd.f32 %v414, %v418
    %v420 = vrot.slane %v419, 4
    %v421 = vadd.f32 %v419, %v420
    %v422 = vrot.slane %v421, 2
    %v423 = vadd.f32 %v421, %v422
    %v424 = vrot.slane %v423, 1
    %v425 = vadd.f32 %v423, %v424
    %v426 = vmax.f32 %v425, 1e-24
    %v427 = vrsqrt.pop %v426
    %v428 = vmul.f32 %v427, %v426
    %v429 = vmul.f32 %v428, %v427
    %v430 = vmul.f32 0.5, %v429
    %v431 = vsub.f32 1.5, %v430
    %v432 = vmul.f32 %v427, %v431
    %vm433 = vweird.f32 %v426
    %vm434 = vweird.f32 %v427
    %vm435 = vmor %vm433, %vm434
    %v436 = vsel %vm435, %v427, %v432
    %v437 = vmul.f32 %v408, %v436
    %v438 = vmul.f32 %v409, %v436
    %v439 = vld [vmem:[%s4] sm:$0xff]
    %v440 = vld [vmem:[%s4 + $0x8] sm:$0xff]
    %v441 = vld [vmem:[%s4 + $0x10] sm:$0xff]
    %v442 = vld [vmem:[%s4 + $0x18] sm:$0xff]
    %v443 = vld [vmem:[%s4 + $0x20] sm:$0xff]
    %v444 = vld [vmem:[%s4 + $0x28] sm:$0xff]
    %v445 = vld [vmem:[%s4 + $0x30] sm:$0xff]
    %v446 = vld [vmem:[%s4 + $0x38] sm:$0xff]
    %v447 = vld [vmem:[%s4 + $0x40] sm:$0xff]
    %v448 = vld [vmem:[%s4 + $0x48] sm:$0xff]
    %v449 = vld [vmem:[%s4 + $0x50] sm:$0xff]
    %v450 = vld [vmem:[%s4 + $0x58] sm:$0xff]
    %v451 = vld [vmem:[%s4 + $0x60] sm:$0xff]
    %v452 = vld [vmem:[%s4 + $0x68] sm:$0xff]
    %v453 = vld [vmem:[%s4 + $0x70] sm:$0xff]
    %v454 = vld [vmem:[%s4 + $0x78] sm:$0xff]
    %v455 = vld [vmem:[%s4 + $0x80] sm:$0xff]
    %v456 = vld [vmem:[%s4 + $0x88] sm:$0xff]
    %v457 = vld [vmem:[%s4 + $0x90] sm:$0xff]
    %v458 = vld [vmem:[%s4 + $0x98] sm:$0xff]
    %v459 = vld [vmem:[%s4 + $0xa0] sm:$0xff]
    %v460 = vld [vmem:[%s4 + $0xa8] sm:$0xff]
    %v461 = vld [vmem:[%s4 + $0xb0] sm:$0xff]
    %v462 = vld [vmem:[%s4 + $0xb8] sm:$0xff]
    %v463 = vld [vmem:[%s4 + $0xc0] sm:$0xff]
    %v464 = vld [vmem:[%s4 + $0xc8] sm:$0xff]
    %v465 = vld [vmem:[%s4 + $0xd0] sm:$0xff]
    %v466 = vld [vmem:[%s4 + $0xd8] sm:$0xff]
    %v467 = vld [vmem:[%s4 + $0xe0] sm:$0xff]
    %v468 = vld [vmem:[%s4 + $0xe8] sm:$0xff]
    %v469 = vld [vmem:[%s4 + $0xf0] sm:$0xff]
    %v470 = vld [vmem:[%s4 + $0xf8] sm:$0xff]
    %v472 = vsel %vm181, %v437, 0
    %v475 = vsel %vm181, %v438, 0
    %477 = vmatpush.msra.mxu0 0.0
    %478 = vmatpush.msra.mxu0 0.0
    %479 = vmatpush.msra.mxu0 0.0
    %480 = vmatpush.msra.mxu0 0.0
    %481 = vmatpush.msra.mxu0 0.0
    %482 = vmatpush.msra.mxu0 0.0
    %483 = vmatpush.msra.mxu0 0.0
    %484 = vmatpush.msra.mxu0 0.0
    %485 = vmatpush.msra.mxu0 %v467
    %486 = vmatpush.msra.mxu0 %v463
    %487 = vmatpush.msra.mxu0 %v459
    %488 = vmatpush.msra.mxu0 %v455
    %489 = vmatpush.msra.mxu0 %v451
    %490 = vmatpush.msra.mxu0 %v447
    %491 = vmatpush.msra.mxu0 %v443
    %492 = vmatpush.msra.mxu0 %v439
    %493 = vmatmul.f32.gmra.mxu0 %v472
    %v494 = vpop.f32.mrf.mxu0
    %v495 = vadd.f32 0.0, %v494
    %496 = vmatmul.f32.gmra.mxu0 %v475
    %v497 = vpop.f32.mrf.mxu0
    %v498 = vadd.f32 0.0, %v497
    %499 = vdwg.mxu0
    %500 = vmatpush.msra.mxu0 0.0
    %501 = vmatpush.msra.mxu0 0.0
    %502 = vmatpush.msra.mxu0 0.0
    %503 = vmatpush.msra.mxu0 0.0
    %504 = vmatpush.msra.mxu0 0.0
    %505 = vmatpush.msra.mxu0 0.0
    %506 = vmatpush.msra.mxu0 0.0
    %507 = vmatpush.msra.mxu0 0.0
    %508 = vmatpush.msra.mxu0 %v468
    %509 = vmatpush.msra.mxu0 %v464
    %510 = vmatpush.msra.mxu0 %v460
    %511 = vmatpush.msra.mxu0 %v456
    %512 = vmatpush.msra.mxu0 %v452
    %513 = vmatpush.msra.mxu0 %v448
    %514 = vmatpush.msra.mxu0 %v444
    %515 = vmatpush.msra.mxu0 %v440
    %516 = vmatmul.f32.gmra.mxu0 %v472
    %v517 = vpop.f32.mrf.mxu0
    %v518 = vadd.f32 0.0, %v517
    %519 = vmatmul.f32.gmra.mxu0 %v475
    %v520 = vpop.f32.mrf.mxu0
    %v521 = vadd.f32 0.0, %v520
    %522 = vdwg.mxu0
    %523 = vmatpush.msra.mxu0 0.0
    %524 = vmatpush.msra.mxu0 0.0
    %525 = vmatpush.msra.mxu0 0.0
    %526 = vmatpush.msra.mxu0 0.0
    %527 = vmatpush.msra.mxu0 0.0
    %528 = vmatpush.msra.mxu0 0.0
    %529 = vmatpush.msra.mxu0 0.0
    %530 = vmatpush.msra.mxu0 0.0
    %531 = vmatpush.msra.mxu0 %v469
    %532 = vmatpush.msra.mxu0 %v465
    %533 = vmatpush.msra.mxu0 %v461
    %534 = vmatpush.msra.mxu0 %v457
    %535 = vmatpush.msra.mxu0 %v453
    %536 = vmatpush.msra.mxu0 %v449
    %537 = vmatpush.msra.mxu0 %v445
    %538 = vmatpush.msra.mxu0 %v441
    %539 = vmatmul.f32.gmra.mxu0 %v472
    %v540 = vpop.f32.mrf.mxu0
    %v541 = vadd.f32 0.0, %v540
    %542 = vmatmul.f32.gmra.mxu0 %v475
    %v543 = vpop.f32.mrf.mxu0
    %v544 = vadd.f32 0.0, %v543
    %545 = vdwg.mxu0
    %546 = vmatpush.msra.mxu0 0.0
    %547 = vmatpush.msra.mxu0 0.0
    %548 = vmatpush.msra.mxu0 0.0
    %549 = vmatpush.msra.mxu0 0.0
    %550 = vmatpush.msra.mxu0 0.0
    %551 = vmatpush.msra.mxu0 0.0
    %552 = vmatpush.msra.mxu0 0.0
    %553 = vmatpush.msra.mxu0 0.0
    %554 = vmatpush.msra.mxu0 %v470
    %555 = vmatpush.msra.mxu0 %v466
    %556 = vmatpush.msra.mxu0 %v462
    %557 = vmatpush.msra.mxu0 %v458
    %558 = vmatpush.msra.mxu0 %v454
    %559 = vmatpush.msra.mxu0 %v450
    %560 = vmatpush.msra.mxu0 %v446
    %561 = vmatpush.msra.mxu0 %v442
    %562 = vmatmul.f32.gmra.mxu0 %v472
    %v563 = vpop.f32.mrf.mxu0
    %v564 = vadd.f32 0.0, %v563
    %565 = vmatmul.f32.gmra.mxu0 %v475
    %v566 = vpop.f32.mrf.mxu0
    %v567 = vadd.f32 0.0, %v566
    %568 = vdwg.mxu0
    %v569 = vld [vmem:[%s5] sm:$0xff]
    %v570 = vld [vmem:[%s5 + $0x8] sm:$0xff]
    %v571 = vld [vmem:[%s5 + $0x10] sm:$0xff]
    %v572 = vld [vmem:[%s5 + $0x18] sm:$0xff]
    %v573 = vld [vmem:[%s5 + $0x20] sm:$0x1f]
    %v574 = vld [vmem:[%s5 + $0x28] sm:$0x1f]
    %v575 = vld [vmem:[%s5 + $0x30] sm:$0x1f]
    %v576 = vld [vmem:[%s5 + $0x38] sm:$0x1f]
    %v577 = vmul.f32 %v495, %v569
    %v578 = vmul.f32 %v518, %v570
    %v579 = vmul.f32 %v541, %v571
    %v580 = vmul.f32 %v564, %v572
    %v581 = vmul.f32 %v498, %v573
    %v582 = vmul.f32 %v521, %v574
    %v583 = vmul.f32 %v544, %v575
    %v584 = vmul.f32 %v567, %v576
    %v585 = vsel %vm234, %v581, 0.0
    %v586 = vadd.f32 %v577, %v585
    %v587 = vrot.slane %v586, 4
    %v588 = vadd.f32 %v586, %v587
    %v589 = vrot.slane %v588, 2
    %v590 = vadd.f32 %v588, %v589
    %v591 = vrot.slane %v590, 1
    %v592 = vadd.f32 %v590, %v591
    %v593 = vsel %vm234, %v582, 0.0
    %v594 = vadd.f32 %v578, %v593
    %v595 = vrot.slane %v594, 4
    %v596 = vadd.f32 %v594, %v595
    %v597 = vrot.slane %v596, 2
    %v598 = vadd.f32 %v596, %v597
    %v599 = vrot.slane %v598, 1
    %v600 = vadd.f32 %v598, %v599
    %v601 = vsel %vm234, %v583, 0.0
    %v602 = vadd.f32 %v579, %v601
    %v603 = vrot.slane %v602, 4
    %v604 = vadd.f32 %v602, %v603
    %v605 = vrot.slane %v604, 2
    %v606 = vadd.f32 %v604, %v605
    %v607 = vrot.slane %v606, 1
    %v608 = vadd.f32 %v606, %v607
    %vm609 = vcmask 261120
    %v610 = vsel %vm609, %v580, 0.0
    %vm611 = vcmask 258048
    %v612 = vsel %vm611, %v584, 0.0
    %v613 = vadd.f32 %v610, %v612
    %v614 = vrot.slane %v613, 4
    %v615 = vadd.f32 %v613, %v614
    %v616 = vrot.slane %v615, 2
    %v617 = vadd.f32 %v615, %v616
    %v618 = vrot.slane %v617, 1
    %v619 = vadd.f32 %v617, %v618
    %v620 = vld [vmem:[%s6] sm:$0xff]
    %v621 = vld [vmem:[%s6 + $0x8] sm:$0xff]
    %v622 = vld [vmem:[%s6 + $0x10] sm:$0xff]
    %v623 = vld [vmem:[%s6 + $0x18] sm:$0xff]
    %v624 = vld [vmem:[%s6 + $0x20] sm:$0xff]
    %v625 = vld [vmem:[%s6 + $0x28] sm:$0xff]
    %v626 = vld [vmem:[%s6 + $0x30] sm:$0xff]
    %v627 = vld [vmem:[%s6 + $0x38] sm:$0xff]
    %v628 = vld [vmem:[%s6 + $0x40] sm:$0xff]
    %v629 = vld [vmem:[%s6 + $0x48] sm:$0xff]
    %v630 = vld [vmem:[%s6 + $0x50] sm:$0xff]
    %v631 = vld [vmem:[%s6 + $0x58] sm:$0xff]
    %v632 = vld [vmem:[%s6 + $0x60] sm:$0xff]
    %v633 = vld [vmem:[%s6 + $0x68] sm:$0xff]
    %v634 = vld [vmem:[%s6 + $0x70] sm:$0xff]
    %v635 = vld [vmem:[%s6 + $0x78] sm:$0xff]
    %v636 = vld [vmem:[%s6 + $0x80] sm:$0xff]
    %v637 = vld [vmem:[%s6 + $0x88] sm:$0xff]
    %v638 = vld [vmem:[%s6 + $0x90] sm:$0xff]
    %v639 = vld [vmem:[%s6 + $0x98] sm:$0xff]
    %v640 = vld [vmem:[%s6 + $0xa0] sm:$0xff]
    %v641 = vld [vmem:[%s6 + $0xa8] sm:$0xff]
    %v642 = vld [vmem:[%s6 + $0xb0] sm:$0xff]
    %v643 = vld [vmem:[%s6 + $0xb8] sm:$0xff]
    %v644 = vld [vmem:[%s6 + $0xc0] sm:$0xff]
    %v645 = vld [vmem:[%s6 + $0xc8] sm:$0xff]
    %v646 = vld [vmem:[%s6 + $0xd0] sm:$0xff]
    %v647 = vld [vmem:[%s6 + $0xd8] sm:$0xff]
    %v648 = vld [vmem:[%s6 + $0xe0] sm:$0xff]
    %v649 = vld [vmem:[%s6 + $0xe8] sm:$0xff]
    %v650 = vld [vmem:[%s6 + $0xf0] sm:$0xff]
    %v651 = vld [vmem:[%s6 + $0xf8] sm:$0xff]
    %v652 = vld [vmem:[%s6 + $0x100] sm:$0xff]
    %v653 = vld [vmem:[%s6 + $0x108] sm:$0xff]
    %v654 = vld [vmem:[%s6 + $0x110] sm:$0xff]
    %v655 = vld [vmem:[%s6 + $0x118] sm:$0xff]
    %v656 = vld [vmem:[%s6 + $0x120] sm:$0xff]
    %v657 = vld [vmem:[%s6 + $0x128] sm:$0xff]
    %v658 = vld [vmem:[%s6 + $0x130] sm:$0xff]
    %v659 = vld [vmem:[%s6 + $0x138] sm:$0xff]
    %v660 = vld [vmem:[%s6 + $0x140] sm:$0xff]
    %v661 = vld [vmem:[%s6 + $0x148] sm:$0xff]
    %v662 = vld [vmem:[%s6 + $0x150] sm:$0xff]
    %v663 = vld [vmem:[%s6 + $0x158] sm:$0xff]
    %v664 = vld [vmem:[%s6 + $0x160] sm:$0xff]
    %v665 = vld [vmem:[%s6 + $0x168] sm:$0xff]
    %v666 = vld [vmem:[%s6 + $0x170] sm:$0xff]
    %v667 = vld [vmem:[%s6 + $0x178] sm:$0xff]
    %v668 = vld [vmem:[%s6 + $0x180] sm:$0xff]
    %v669 = vld [vmem:[%s6 + $0x188] sm:$0xff]
    %v670 = vld [vmem:[%s6 + $0x190] sm:$0xff]
    %v671 = vld [vmem:[%s6 + $0x198] sm:$0xff]
    %v672 = vld [vmem:[%s7] sm:$0x1]
    %v674 = vsel %vm609, %v619, 0
    %676 = vmatpush.msra.mxu0 %v635
    %677 = vmatpush.msra.mxu0 %v634
    %678 = vmatpush.msra.mxu0 %v633
    %679 = vmatpush.msra.mxu0 %v632
    %680 = vmatpush.msra.mxu0 %v631
    %681 = vmatpush.msra.mxu0 %v630
    %682 = vmatpush.msra.mxu0 %v629
    %683 = vmatpush.msra.mxu0 %v628
    %684 = vmatpush.msra.mxu0 %v627
    %685 = vmatpush.msra.mxu0 %v626
    %686 = vmatpush.msra.mxu0 %v625
    %687 = vmatpush.msra.mxu0 %v624
    %688 = vmatpush.msra.mxu0 %v623
    %689 = vmatpush.msra.mxu0 %v622
    %690 = vmatpush.msra.mxu0 %v621
    %691 = vmatpush.msra.mxu0 %v620
    %692 = vmatmul.f32.gmra.mxu0 %v592
    %v693 = vpop.f32.mrf.mxu0
    %v694 = vadd.f32 %v672, %v693
    %695 = vdwg.mxu0
    %696 = vmatpush.msra.mxu0 %v651
    %697 = vmatpush.msra.mxu0 %v650
    %698 = vmatpush.msra.mxu0 %v649
    %699 = vmatpush.msra.mxu0 %v648
    %700 = vmatpush.msra.mxu0 %v647
    %701 = vmatpush.msra.mxu0 %v646
    %702 = vmatpush.msra.mxu0 %v645
    %703 = vmatpush.msra.mxu0 %v644
    %704 = vmatpush.msra.mxu0 %v643
    %705 = vmatpush.msra.mxu0 %v642
    %706 = vmatpush.msra.mxu0 %v641
    %707 = vmatpush.msra.mxu0 %v640
    %708 = vmatpush.msra.mxu0 %v639
    %709 = vmatpush.msra.mxu0 %v638
    %710 = vmatpush.msra.mxu0 %v637
    %711 = vmatpush.msra.mxu0 %v636
    %712 = vmatmul.f32.gmra.mxu0 %v600
    %v713 = vpop.f32.mrf.mxu0
    %v714 = vadd.f32 %v694, %v713
    %715 = vdwg.mxu0
    %716 = vmatpush.msra.mxu0 %v667
    %717 = vmatpush.msra.mxu0 %v666
    %718 = vmatpush.msra.mxu0 %v665
    %719 = vmatpush.msra.mxu0 %v664
    %720 = vmatpush.msra.mxu0 %v663
    %721 = vmatpush.msra.mxu0 %v662
    %722 = vmatpush.msra.mxu0 %v661
    %723 = vmatpush.msra.mxu0 %v660
    %724 = vmatpush.msra.mxu0 %v659
    %725 = vmatpush.msra.mxu0 %v658
    %726 = vmatpush.msra.mxu0 %v657
    %727 = vmatpush.msra.mxu0 %v656
    %728 = vmatpush.msra.mxu0 %v655
    %729 = vmatpush.msra.mxu0 %v654
    %730 = vmatpush.msra.mxu0 %v653
    %731 = vmatpush.msra.mxu0 %v652
    %732 = vmatmul.f32.gmra.mxu0 %v608
    %v733 = vpop.f32.mrf.mxu0
    %v734 = vadd.f32 %v714, %v733
    %735 = vdwg.mxu0
    %736 = vmatpush.msra.mxu0 0.0
    %737 = vmatpush.msra.mxu0 0.0
    %738 = vmatpush.msra.mxu0 0.0
    %739 = vmatpush.msra.mxu0 0.0
    %740 = vmatpush.msra.mxu0 0.0
    %741 = vmatpush.msra.mxu0 0.0
    %742 = vmatpush.msra.mxu0 0.0
    %743 = vmatpush.msra.mxu0 0.0
    %744 = vmatpush.msra.mxu0 0.0
    %745 = vmatpush.msra.mxu0 0.0
    %746 = vmatpush.msra.mxu0 0.0
    %747 = vmatpush.msra.mxu0 0.0
    %748 = vmatpush.msra.mxu0 %v671
    %749 = vmatpush.msra.mxu0 %v670
    %750 = vmatpush.msra.mxu0 %v669
    %751 = vmatpush.msra.mxu0 %v668
    %752 = vmatmul.f32.gmra.mxu0 %v674
    %v753 = vpop.f32.mrf.mxu0
    %v754 = vadd.f32 %v734, %v753
    %755 = vdwg.mxu0
    %v756 = vmax.f32 %v754, 0.0
    %vm757 = vcmask 253952
    %758 = vst.msk [vmem:[#allocation2] sm:$0x1] %vm757, %v756
    %759 = vmatpush.xpose.msra.mxu0 0.0
    %760 = vmatpush.xpose.msra.mxu0 0.0
    %761 = vmatpush.xpose.msra.mxu0 0.0
    %762 = vmatpush.xpose.msra.mxu0 0.0
    %763 = vmatpush.xpose.msra.mxu0 0.0
    %764 = vmatpush.xpose.msra.mxu0 0.0
    %765 = vmatpush.xpose.msra.mxu0 0.0
    %766 = vmatpush.xpose.msra.mxu0 0.0
    %767 = vmatpush.xpose.msra.mxu0 0.0
    %768 = vmatpush.xpose.msra.mxu0 0.0
    %769 = vmatpush.xpose.msra.mxu0 0.0
    %770 = vmatpush.xpose.msra.mxu0 0.0
    %771 = vmatpush.xpose.msra.mxu0 0.0
    %772 = vmatpush.xpose.msra.mxu0 0.0
    %773 = vmatpush.xpose.msra.mxu0 %v284
    %774 = vmatpush.xpose.msra.mxu0 %v282
    %775 = vmatmul.f32.gmra.mxu0 %v150
    %v776 = vpop.f32.mrf.mxu0
    %v777 = vadd.f32 0.0, %v776
    %778 = vmatmul.f32.gmra.mxu0 %v152
    %v779 = vpop.f32.mrf.mxu0
    %v780 = vadd.f32 0.0, %v779
    %781 = vmatmul.f32.gmra.mxu0 %v154
    %v782 = vpop.f32.mrf.mxu0
    %v783 = vadd.f32 0.0, %v782
    %784 = vmatmul.f32.gmra.mxu0 %v156
    %v785 = vpop.f32.mrf.mxu0
    %v786 = vadd.f32 0.0, %v785
    %787 = vmatmul.f32.gmra.mxu0 %v158
    %v788 = vpop.f32.mrf.mxu0
    %v789 = vadd.f32 0.0, %v788
    %790 = vmatmul.f32.gmra.mxu0 %v160
    %v791 = vpop.f32.mrf.mxu0
    %v792 = vadd.f32 0.0, %v791
    %793 = vmatmul.f32.gmra.mxu0 %v162
    %v794 = vpop.f32.mrf.mxu0
    %v795 = vadd.f32 0.0, %v794
    %796 = vmatmul.f32.gmra.mxu0 %v164
    %v797 = vpop.f32.mrf.mxu0
    %v798 = vadd.f32 0.0, %v797
    %799 = vmatmul.f32.gmra.mxu0 %v166
    %v800 = vpop.f32.mrf.mxu0
    %v801 = vadd.f32 0.0, %v800
    %802 = vdwg.mxu0
    %803 = vxpose.xlu0.b32.start [1/16] %v777, 128
    %804 = vxpose.xlu0.b32.cont [2/16] %v780, 128
    %805 = vxpose.xlu0.b32.cont [3/16] %v783, 128
    %806 = vxpose.xlu0.b32.cont [4/16] %v786, 128
    %807 = vxpose.xlu0.b32.cont [5/16] %v789, 128
    %808 = vxpose.xlu0.b32.cont [6/16] %v792, 128
    %809 = vxpose.xlu0.b32.cont [7/16] %v795, 128
    %810 = vxpose.xlu0.b32.cont [8/16] %v798, 128
    %811 = vxpose.xlu0.b32.cont [9/16] %v801, 128
    %812 = vxpose.xlu0.b32.cont [10/16] 0.0, 128
    %813 = vxpose.xlu0.b32.cont [11/16] 0.0, 128
    %814 = vxpose.xlu0.b32.cont [12/16] 0.0, 128
    %815 = vxpose.xlu0.b32.cont [13/16] 0.0, 128
    %816 = vxpose.xlu0.b32.cont [14/16] 0.0, 128
    %817 = vxpose.xlu0.b32.cont [15/16] 0.0, 128
    %818 = vxpose.xlu0.b32.end [16/16] 0.0, 128
    %v819 = vpop.trf.xlu0
    %v820 = vpop.trf.xlu0
    %v821 = vpop.trf.xlu0
    %v822 = vpop.trf.xlu0
    %v823 = vpop.trf.xlu0
    %v824 = vpop.trf.xlu0
    %v825 = vpop.trf.xlu0
    %v826 = vpop.trf.xlu0
    %v827 = vpop.trf.xlu0
    %v828 = vpop.trf.xlu0
    %v829 = vpop.trf.xlu0
    %v830 = vpop.trf.xlu0
    %v831 = vpop.trf.xlu0
    %v832 = vpop.trf.xlu0
    %v833 = vpop.trf.xlu0
    %v834 = vpop.trf.xlu0
    %v835 = vld [vmem:[%s3] sm:$0xff]
    %v836 = vld [vmem:[%s3 + $0x8] sm:$0x1f]
    %838 = vset.pattern.permute.xlu0 64
    %839 = vperm.xlu0 %838, %v819
    %v840 = vpop.permute.xlu0 %839
    %843 = vset.pattern.permute.xlu0 64
    %844 = vperm.xlu0 %843, %v820
    %v845 = vpop.permute.xlu0 %844
    %v847 = vmul.f32 %v835, %v840
    %v848 = vmul.f32 %v836, %v845
    %v849 = vsub.f32 %v819, %v847
    %v850 = vsub.f32 %v820, %v848
    %v851 = vmul.f32 %v849, %v849
    %v852 = vmul.f32 %v850, %v850
    %v853 = vsel %vm181, %v851, 0.0
    %854 = vadd.xlane.f32.xlu0 %v853
    %v855 = vpop.xlane.xlu0 %854
    %v856 = vsel %vm382, %v852, 0.0
    %857 = vadd.xlane.f32.xlu0 %v856
    %v858 = vpop.xlane.xlu0 %857
    %v859 = vmax.f32 %v855, 1e-24
    %v860 = vmax.f32 %v858, 1e-24
    %v861 = vrsqrt.pop %v859
    %v862 = vmul.f32 %v861, %v859
    %v863 = vmul.f32 %v862, %v861
    %v864 = vmul.f32 0.5, %v863
    %v865 = vsub.f32 1.5, %v864
    %v866 = vmul.f32 %v861, %v865
    %vm867 = vweird.f32 %v859
    %vm868 = vweird.f32 %v861
    %vm869 = vmor %vm867, %vm868
    %v870 = vsel %vm869, %v861, %v866
    %v871 = vrsqrt.pop %v860
    %v872 = vmul.f32 %v871, %v860
    %v873 = vmul.f32 %v872, %v871
    %v874 = vmul.f32 0.5, %v873
    %v875 = vsub.f32 1.5, %v874
    %v876 = vmul.f32 %v871, %v875
    %vm877 = vweird.f32 %v860
    %vm878 = vweird.f32 %v871
    %vm879 = vmor %vm877, %vm878
    %v880 = vsel %vm879, %v871, %v876
    %v881 = vmul.f32 %v849, %v870
    %v882 = vmul.f32 %v850, %v880
    %v883 = vmul.f32 %v881, %v881
    %v884 = vmul.f32 %v882, %v882
    %v885 = vsel %vm181, %v883, 0.0
    %886 = vadd.xlane.f32.xlu0 %v885
    %v887 = vpop.xlane.xlu0 %886
    %v888 = vsel %vm382, %v884, 0.0
    %889 = vadd.xlane.f32.xlu0 %v888
    %v890 = vpop.xlane.xlu0 %889
    %v891 = vsel %vm234, %v890, 0.0
    %v892 = vadd.f32 %v887, %v891
    %v893 = vrot.slane %v892, 4
    %v894 = vadd.f32 %v892, %v893
    %v895 = vrot.slane %v894, 2
    %v896 = vadd.f32 %v894, %v895
    %v897 = vrot.slane %v896, 1
    %v898 = vadd.f32 %v896, %v897
    %v899 = vmax.f32 %v898, 1e-24
    %v900 = vrsqrt.pop %v899
    %v901 = vmul.f32 %v900, %v899
    %v902 = vmul.f32 %v901, %v900
    %v903 = vmul.f32 0.5, %v902
    %v904 = vsub.f32 1.5, %v903
    %v905 = vmul.f32 %v900, %v904
    %vm906 = vweird.f32 %v899
    %vm907 = vweird.f32 %v900
    %vm908 = vmor %vm906, %vm907
    %v909 = vsel %vm908, %v900, %v905
    %v910 = vmul.f32 %v881, %v909
    %v911 = vmul.f32 %v882, %v909
    %v912 = vld [vmem:[%s4] sm:$0xff]
    %v913 = vld [vmem:[%s4 + $0x8] sm:$0xff]
    %v914 = vld [vmem:[%s4 + $0x10] sm:$0xff]
    %v915 = vld [vmem:[%s4 + $0x18] sm:$0xff]
    %v916 = vld [vmem:[%s4 + $0x20] sm:$0xff]
    %v917 = vld [vmem:[%s4 + $0x28] sm:$0xff]
    %v918 = vld [vmem:[%s4 + $0x30] sm:$0xff]
    %v919 = vld [vmem:[%s4 + $0x38] sm:$0xff]
    %v920 = vld [vmem:[%s4 + $0x40] sm:$0xff]
    %v921 = vld [vmem:[%s4 + $0x48] sm:$0xff]
    %v922 = vld [vmem:[%s4 + $0x50] sm:$0xff]
    %v923 = vld [vmem:[%s4 + $0x58] sm:$0xff]
    %v924 = vld [vmem:[%s4 + $0x60] sm:$0xff]
    %v925 = vld [vmem:[%s4 + $0x68] sm:$0xff]
    %v926 = vld [vmem:[%s4 + $0x70] sm:$0xff]
    %v927 = vld [vmem:[%s4 + $0x78] sm:$0xff]
    %v928 = vld [vmem:[%s4 + $0x80] sm:$0xff]
    %v929 = vld [vmem:[%s4 + $0x88] sm:$0xff]
    %v930 = vld [vmem:[%s4 + $0x90] sm:$0xff]
    %v931 = vld [vmem:[%s4 + $0x98] sm:$0xff]
    %v932 = vld [vmem:[%s4 + $0xa0] sm:$0xff]
    %v933 = vld [vmem:[%s4 + $0xa8] sm:$0xff]
    %v934 = vld [vmem:[%s4 + $0xb0] sm:$0xff]
    %v935 = vld [vmem:[%s4 + $0xb8] sm:$0xff]
    %v936 = vld [vmem:[%s4 + $0xc0] sm:$0xff]
    %v937 = vld [vmem:[%s4 + $0xc8] sm:$0xff]
    %v938 = vld [vmem:[%s4 + $0xd0] sm:$0xff]
    %v939 = vld [vmem:[%s4 + $0xd8] sm:$0xff]
    %v940 = vld [vmem:[%s4 + $0xe0] sm:$0xff]
    %v941 = vld [vmem:[%s4 + $0xe8] sm:$0xff]
    %v942 = vld [vmem:[%s4 + $0xf0] sm:$0xff]
    %v943 = vld [vmem:[%s4 + $0xf8] sm:$0xff]
    %v945 = vsel %vm181, %v910, 0
    %v948 = vsel %vm181, %v911, 0
    %950 = vmatpush.msra.mxu0 0.0
    %951 = vmatpush.msra.mxu0 0.0
    %952 = vmatpush.msra.mxu0 0.0
    %953 = vmatpush.msra.mxu0 0.0
    %954 = vmatpush.msra.mxu0 0.0
    %955 = vmatpush.msra.mxu0 0.0
    %956 = vmatpush.msra.mxu0 0.0
    %957 = vmatpush.msra.mxu0 0.0
    %958 = vmatpush.msra.mxu0 %v940
    %959 = vmatpush.msra.mxu0 %v936
    %960 = vmatpush.msra.mxu0 %v932
    %961 = vmatpush.msra.mxu0 %v928
    %962 = vmatpush.msra.mxu0 %v924
    %963 = vmatpush.msra.mxu0 %v920
    %964 = vmatpush.msra.mxu0 %v916
    %965 = vmatpush.msra.mxu0 %v912
    %966 = vmatmul.f32.gmra.mxu0 %v945
    %v967 = vpop.f32.mrf.mxu0
    %v968 = vadd.f32 0.0, %v967
    %969 = vmatmul.f32.gmra.mxu0 %v948
    %v970 = vpop.f32.mrf.mxu0
    %v971 = vadd.f32 0.0, %v970
    %972 = vdwg.mxu0
    %973 = vmatpush.msra.mxu0 0.0
    %974 = vmatpush.msra.mxu0 0.0
    %975 = vmatpush.msra.mxu0 0.0
    %976 = vmatpush.msra.mxu0 0.0
    %977 = vmatpush.msra.mxu0 0.0
    %978 = vmatpush.msra.mxu0 0.0
    %979 = vmatpush.msra.mxu0 0.0
    %980 = vmatpush.msra.mxu0 0.0
    %981 = vmatpush.msra.mxu0 %v941
    %982 = vmatpush.msra.mxu0 %v937
    %983 = vmatpush.msra.mxu0 %v933
    %984 = vmatpush.msra.mxu0 %v929
    %985 = vmatpush.msra.mxu0 %v925
    %986 = vmatpush.msra.mxu0 %v921
    %987 = vmatpush.msra.mxu0 %v917
    %988 = vmatpush.msra.mxu0 %v913
    %989 = vmatmul.f32.gmra.mxu0 %v945
    %v990 = vpop.f32.mrf.mxu0
    %v991 = vadd.f32 0.0, %v990
    %992 = vmatmul.f32.gmra.mxu0 %v948
    %v993 = vpop.f32.mrf.mxu0
    %v994 = vadd.f32 0.0, %v993
    %995 = vdwg.mxu0
    %996 = vmatpush.msra.mxu0 0.0
    %997 = vmatpush.msra.mxu0 0.0
    %998 = vmatpush.msra.mxu0 0.0
    %999 = vmatpush.msra.mxu0 0.0
    %1000 = vmatpush.msra.mxu0 0.0
    %1001 = vmatpush.msra.mxu0 0.0
    %1002 = vmatpush.msra.mxu0 0.0
    %1003 = vmatpush.msra.mxu0 0.0
    %1004 = vmatpush.msra.mxu0 %v942
    %1005 = vmatpush.msra.mxu0 %v938
    %1006 = vmatpush.msra.mxu0 %v934
    %1007 = vmatpush.msra.mxu0 %v930
    %1008 = vmatpush.msra.mxu0 %v926
    %1009 = vmatpush.msra.mxu0 %v922
    %1010 = vmatpush.msra.mxu0 %v918
    %1011 = vmatpush.msra.mxu0 %v914
    %1012 = vmatmul.f32.gmra.mxu0 %v945
    %v1013 = vpop.f32.mrf.mxu0
    %v1014 = vadd.f32 0.0, %v1013
    %1015 = vmatmul.f32.gmra.mxu0 %v948
    %v1016 = vpop.f32.mrf.mxu0
    %v1017 = vadd.f32 0.0, %v1016
    %1018 = vdwg.mxu0
    %1019 = vmatpush.msra.mxu0 0.0
    %1020 = vmatpush.msra.mxu0 0.0
    %1021 = vmatpush.msra.mxu0 0.0
    %1022 = vmatpush.msra.mxu0 0.0
    %1023 = vmatpush.msra.mxu0 0.0
    %1024 = vmatpush.msra.mxu0 0.0
    %1025 = vmatpush.msra.mxu0 0.0
    %1026 = vmatpush.msra.mxu0 0.0
    %1027 = vmatpush.msra.mxu0 %v943
    %1028 = vmatpush.msra.mxu0 %v939
    %1029 = vmatpush.msra.mxu0 %v935
    %1030 = vmatpush.msra.mxu0 %v931
    %1031 = vmatpush.msra.mxu0 %v927
    %1032 = vmatpush.msra.mxu0 %v923
    %1033 = vmatpush.msra.mxu0 %v919
    %1034 = vmatpush.msra.mxu0 %v915
    %1035 = vmatmul.f32.gmra.mxu0 %v945
    %v1036 = vpop.f32.mrf.mxu0
    %v1037 = vadd.f32 0.0, %v1036
    %1038 = vmatmul.f32.gmra.mxu0 %v948
    %v1039 = vpop.f32.mrf.mxu0
    %v1040 = vadd.f32 0.0, %v1039
    %1041 = vdwg.mxu0
    %v1042 = vld [vmem:[%s5] sm:$0xff]
    %v1043 = vld [vmem:[%s5 + $0x8] sm:$0xff]
    %v1044 = vld [vmem:[%s5 + $0x10] sm:$0xff]
    %v1045 = vld [vmem:[%s5 + $0x18] sm:$0xff]
    %v1046 = vld [vmem:[%s5 + $0x20] sm:$0x1f]
    %v1047 = vld [vmem:[%s5 + $0x28] sm:$0x1f]
    %v1048 = vld [vmem:[%s5 + $0x30] sm:$0x1f]
    %v1049 = vld [vmem:[%s5 + $0x38] sm:$0x1f]
    %v1050 = vmul.f32 %v968, %v1042
    %v1051 = vmul.f32 %v991, %v1043
    %v1052 = vmul.f32 %v1014, %v1044
    %v1053 = vmul.f32 %v1037, %v1045
    %v1054 = vmul.f32 %v971, %v1046
    %v1055 = vmul.f32 %v994, %v1047
    %v1056 = vmul.f32 %v1017, %v1048
    %v1057 = vmul.f32 %v1040, %v1049
    %v1058 = vsel %vm234, %v1054, 0.0
    %v1059 = vadd.f32 %v1050, %v1058
    %v1060 = vrot.slane %v1059, 4
    %v1061 = vadd.f32 %v1059, %v1060
    %v1062 = vrot.slane %v1061, 2
    %v1063 = vadd.f32 %v1061, %v1062
    %v1064 = vrot.slane %v1063, 1
    %v1065 = vadd.f32 %v1063, %v1064
    %v1066 = vsel %vm234, %v1055, 0.0
    %v1067 = vadd.f32 %v1051, %v1066
    %v1068 = vrot.slane %v1067, 4
    %v1069 = vadd.f32 %v1067, %v1068
    %v1070 = vrot.slane %v1069, 2
    %v1071 = vadd.f32 %v1069, %v1070
    %v1072 = vrot.slane %v1071, 1
    %v1073 = vadd.f32 %v1071, %v1072
    %v1074 = vsel %vm234, %v1056, 0.0
    %v1075 = vadd.f32 %v1052, %v1074
    %v1076 = vrot.slane %v1075, 4
    %v1077 = vadd.f32 %v1075, %v1076
    %v1078 = vrot.slane %v1077, 2
    %v1079 = vadd.f32 %v1077, %v1078
    %v1080 = vrot.slane %v1079, 1
    %v1081 = vadd.f32 %v1079, %v1080
    %v1082 = vsel %vm609, %v1053, 0.0
    %v1083 = vsel %vm611, %v1057, 0.0
    %v1084 = vadd.f32 %v1082, %v1083
    %v1085 = vrot.slane %v1084, 4
    %v1086 = vadd.f32 %v1084, %v1085
    %v1087 = vrot.slane %v1086, 2
    %v1088 = vadd.f32 %v1086, %v1087
    %v1089 = vrot.slane %v1088, 1
    %v1090 = vadd.f32 %v1088, %v1089
    %v1091 = vld [vmem:[%s6] sm:$0xff]
    %v1092 = vld [vmem:[%s6 + $0x8] sm:$0xff]
    %v1093 = vld [vmem:[%s6 + $0x10] sm:$0xff]
    %v1094 = vld [vmem:[%s6 + $0x18] sm:$0xff]
    %v1095 = vld [vmem:[%s6 + $0x20] sm:$0xff]
    %v1096 = vld [vmem:[%s6 + $0x28] sm:$0xff]
    %v1097 = vld [vmem:[%s6 + $0x30] sm:$0xff]
    %v1098 = vld [vmem:[%s6 + $0x38] sm:$0xff]
    %v1099 = vld [vmem:[%s6 + $0x40] sm:$0xff]
    %v1100 = vld [vmem:[%s6 + $0x48] sm:$0xff]
    %v1101 = vld [vmem:[%s6 + $0x50] sm:$0xff]
    %v1102 = vld [vmem:[%s6 + $0x58] sm:$0xff]
    %v1103 = vld [vmem:[%s6 + $0x60] sm:$0xff]
    %v1104 = vld [vmem:[%s6 + $0x68] sm:$0xff]
    %v1105 = vld [vmem:[%s6 + $0x70] sm:$0xff]
    %v1106 = vld [vmem:[%s6 + $0x78] sm:$0xff]
    %v1107 = vld [vmem:[%s6 + $0x80] sm:$0xff]
    %v1108 = vld [vmem:[%s6 + $0x88] sm:$0xff]
    %v1109 = vld [vmem:[%s6 + $0x90] sm:$0xff]
    %v1110 = vld [vmem:[%s6 + $0x98] sm:$0xff]
    %v1111 = vld [vmem:[%s6 + $0xa0] sm:$0xff]
    %v1112 = vld [vmem:[%s6 + $0xa8] sm:$0xff]
    %v1113 = vld [vmem:[%s6 + $0xb0] sm:$0xff]
    %v1114 = vld [vmem:[%s6 + $0xb8] sm:$0xff]
    %v1115 = vld [vmem:[%s6 + $0xc0] sm:$0xff]
    %v1116 = vld [vmem:[%s6 + $0xc8] sm:$0xff]
    %v1117 = vld [vmem:[%s6 + $0xd0] sm:$0xff]
    %v1118 = vld [vmem:[%s6 + $0xd8] sm:$0xff]
    %v1119 = vld [vmem:[%s6 + $0xe0] sm:$0xff]
    %v1120 = vld [vmem:[%s6 + $0xe8] sm:$0xff]
    %v1121 = vld [vmem:[%s6 + $0xf0] sm:$0xff]
    %v1122 = vld [vmem:[%s6 + $0xf8] sm:$0xff]
    %v1123 = vld [vmem:[%s6 + $0x100] sm:$0xff]
    %v1124 = vld [vmem:[%s6 + $0x108] sm:$0xff]
    %v1125 = vld [vmem:[%s6 + $0x110] sm:$0xff]
    %v1126 = vld [vmem:[%s6 + $0x118] sm:$0xff]
    %v1127 = vld [vmem:[%s6 + $0x120] sm:$0xff]
    %v1128 = vld [vmem:[%s6 + $0x128] sm:$0xff]
    %v1129 = vld [vmem:[%s6 + $0x130] sm:$0xff]
    %v1130 = vld [vmem:[%s6 + $0x138] sm:$0xff]
    %v1131 = vld [vmem:[%s6 + $0x140] sm:$0xff]
    %v1132 = vld [vmem:[%s6 + $0x148] sm:$0xff]
    %v1133 = vld [vmem:[%s6 + $0x150] sm:$0xff]
    %v1134 = vld [vmem:[%s6 + $0x158] sm:$0xff]
    %v1135 = vld [vmem:[%s6 + $0x160] sm:$0xff]
    %v1136 = vld [vmem:[%s6 + $0x168] sm:$0xff]
    %v1137 = vld [vmem:[%s6 + $0x170] sm:$0xff]
    %v1138 = vld [vmem:[%s6 + $0x178] sm:$0xff]
    %v1139 = vld [vmem:[%s6 + $0x180] sm:$0xff]
    %v1140 = vld [vmem:[%s6 + $0x188] sm:$0xff]
    %v1141 = vld [vmem:[%s6 + $0x190] sm:$0xff]
    %v1142 = vld [vmem:[%s6 + $0x198] sm:$0xff]
    %v1143 = vld [vmem:[%s7] sm:$0x1]
    %v1145 = vsel %vm609, %v1090, 0
    %1147 = vmatpush.msra.mxu0 %v1106
    %1148 = vmatpush.msra.mxu0 %v1105
    %1149 = vmatpush.msra.mxu0 %v1104
    %1150 = vmatpush.msra.mxu0 %v1103
    %1151 = vmatpush.msra.mxu0 %v1102
    %1152 = vmatpush.msra.mxu0 %v1101
    %1153 = vmatpush.msra.mxu0 %v1100
    %1154 = vmatpush.msra.mxu0 %v1099
    %1155 = vmatpush.msra.mxu0 %v1098
    %1156 = vmatpush.msra.mxu0 %v1097
    %1157 = vmatpush.msra.mxu0 %v1096
    %1158 = vmatpush.msra.mxu0 %v1095
    %1159 = vmatpush.msra.mxu0 %v1094
    %1160 = vmatpush.msra.mxu0 %v1093
    %1161 = vmatpush.msra.mxu0 %v1092
    %1162 = vmatpush.msra.mxu0 %v1091
    %1163 = vmatmul.f32.gmra.mxu0 %v1065
    %v1164 = vpop.f32.mrf.mxu0
    %v1165 = vadd.f32 %v1143, %v1164
    %1166 = vdwg.mxu0
    %1167 = vmatpush.msra.mxu0 %v1122
    %1168 = vmatpush.msra.mxu0 %v1121
    %1169 = vmatpush.msra.mxu0 %v1120
    %1170 = vmatpush.msra.mxu0 %v1119
    %1171 = vmatpush.msra.mxu0 %v1118
    %1172 = vmatpush.msra.mxu0 %v1117
    %1173 = vmatpush.msra.mxu0 %v1116
    %1174 = vmatpush.msra.mxu0 %v1115
    %1175 = vmatpush.msra.mxu0 %v1114
    %1176 = vmatpush.msra.mxu0 %v1113
    %1177 = vmatpush.msra.mxu0 %v1112
    %1178 = vmatpush.msra.mxu0 %v1111
    %1179 = vmatpush.msra.mxu0 %v1110
    %1180 = vmatpush.msra.mxu0 %v1109
    %1181 = vmatpush.msra.mxu0 %v1108
    %1182 = vmatpush.msra.mxu0 %v1107
    %1183 = vmatmul.f32.gmra.mxu0 %v1073
    %v1184 = vpop.f32.mrf.mxu0
    %v1185 = vadd.f32 %v1165, %v1184
    %1186 = vdwg.mxu0
    %1187 = vmatpush.msra.mxu0 %v1138
    %1188 = vmatpush.msra.mxu0 %v1137
    %1189 = vmatpush.msra.mxu0 %v1136
    %1190 = vmatpush.msra.mxu0 %v1135
    %1191 = vmatpush.msra.mxu0 %v1134
    %1192 = vmatpush.msra.mxu0 %v1133
    %1193 = vmatpush.msra.mxu0 %v1132
    %1194 = vmatpush.msra.mxu0 %v1131
    %1195 = vmatpush.msra.mxu0 %v1130
    %1196 = vmatpush.msra.mxu0 %v1129
    %1197 = vmatpush.msra.mxu0 %v1128
    %1198 = vmatpush.msra.mxu0 %v1127
    %1199 = vmatpush.msra.mxu0 %v1126
    %1200 = vmatpush.msra.mxu0 %v1125
    %1201 = vmatpush.msra.mxu0 %v1124
    %1202 = vmatpush.msra.mxu0 %v1123
    %1203 = vmatmul.f32.gmra.mxu0 %v1081
    %v1204 = vpop.f32.mrf.mxu0
    %v1205 = vadd.f32 %v1185, %v1204
    %1206 = vdwg.mxu0
    %1207 = vmatpush.msra.mxu0 0.0
    %1208 = vmatpush.msra.mxu0 0.0
    %1209 = vmatpush.msra.mxu0 0.0
    %1210 = vmatpush.msra.mxu0 0.0
    %1211 = vmatpush.msra.mxu0 0.0
    %1212 = vmatpush.msra.mxu0 0.0
    %1213 = vmatpush.msra.mxu0 0.0
    %1214 = vmatpush.msra.mxu0 0.0
    %1215 = vmatpush.msra.mxu0 0.0
    %1216 = vmatpush.msra.mxu0 0.0
    %1217 = vmatpush.msra.mxu0 0.0
    %1218 = vmatpush.msra.mxu0 0.0
    %1219 = vmatpush.msra.mxu0 %v1142
    %1220 = vmatpush.msra.mxu0 %v1141
    %1221 = vmatpush.msra.mxu0 %v1140
    %1222 = vmatpush.msra.mxu0 %v1139
    %1223 = vmatmul.f32.gmra.mxu0 %v1145
    %v1224 = vpop.f32.mrf.mxu0
    %v1225 = vadd.f32 %v1205, %v1224
    %1226 = vdwg.mxu0
    %v1227 = vmax.f32 %v1225, 0.0
    %1228 = vst.msk [vmem:[#allocation2 + $0x1] sm:$0x1] %vm757, %v1227
    // Predicated region
    $region34: #{tpu_custom_call.1} parent=1 // pred_check
      _
    $region35: #{tpu_custom_call.1} parent=1 // pred_check_branch
      %1230 = sbr.rel (0) target = $region37
    $region36: #{tpu_custom_call.1} parent=1 // pred_region
      %1232 = vsyncadd [#allocation3], 0
      %s1234 = sshll.u32 [#allocation2], 4
      %s1235 = int_to_ptr.vmem [resolvable:$true] %s1234
      %s1236 = sshll.u32 %s8, 4
      %s1237 = int_to_ptr.hbm [resolvable:$true] %s1236
      %1239 = dma.vmem_to_hbm [thread:$0]  %s1235, 32, %s1237, [#allocation3]
    $region37: #{tpu_custom_call.1} parent=1 // pred_fallthru
      _
    // Predicated region
    $region38: #{tpu_custom_call.1} parent=1 // pred_check
      _
    $region39: #{tpu_custom_call.1} parent=1 // pred_check_branch
      %1241 = sbr.rel (0) target = $region41
    $region40: #{tpu_custom_call.1} parent=1 // pred_region
      %1243 = dma.done [#allocation3], 32
    $region41: #{tpu_custom_call.1} parent=1 // pred_fallthru
      _
    %1244 = vsyncpa [#allocation3], 1

</llo_original>
